<compile_context>
chip_gen: v6e
topology: v6e:2x2x1
jax: 0.10.0
libtpu: 0.0.40
codegen_flags: <defaults>
</compile_context>

<pallas_src>
import functools

import jax
import jax.numpy as jnp
from jax.experimental import pallas as pl
from jax.experimental.pallas import tpu as pltpu


def _round_up(x, m):
    return (x + m - 1) // m * m


def _pad_gate_dim(a, h, h_pad):
    """Pad the last axis (4*h, PyTorch gate order [i, f, g, o]) gate-by-gate
    so each gate block is h_pad (lane-aligned) wide."""
    if h_pad == h:
        return a
    lead = a.shape[:-1]
    a4 = a.reshape(lead + (4, h))
    a4 = jnp.pad(a4, [(0, 0)] * len(lead) + [(0, 0), (0, h_pad - h)])
    return a4.reshape(lead + (4 * h_pad,))


def _lstm_rec_kernel(len_ref, gx_ref, whh_ref,
                     out_ref, hn_ref, cn_ref,
                     h_scr, c_scr, *, hidden_pad, t_chunk):
    """Recurrent LSTM body over one (batch-tile, time-chunk) block.

    grid = (batch_tiles ["parallel"], time_blocks ["arbitrary"/sequential]).
    The input projection is precomputed; per timestep this does only
    h_prev @ W_hh^T (bf16 MXU, f32 accumulate) + gate nonlinearities +
    packed-sequence masking.
    """
    H = hidden_pad
    tb = pl.program_id(1)

    @pl.when(tb == 0)
    def _():
        h_scr[...] = jnp.zeros_like(h_scr)
        c_scr[...] = jnp.zeros_like(c_scr)

    lengths = len_ref[...]             # (bt, H) int32 — full-vreg compare target
    whh = whh_ref[...]                 # (H, 4H) bf16 — MXU operand
    t0 = tb * t_chunk

    def step(tt, carry):
        h_prev, c_prev = carry         # f32 recurrent state
        gates = gx_ref[tt] + jnp.dot(h_prev.astype(jnp.bfloat16), whh,
                                     preferred_element_type=jnp.float32)
        # H is padded to a multiple of 128, so these are lane-aligned slabs.
        i_g = jax.nn.sigmoid(gates[:, 0 * H:1 * H])
        f_g = jax.nn.sigmoid(gates[:, 1 * H:2 * H])
        g_g = jnp.tanh(gates[:, 2 * H:3 * H])
        o_g = jax.nn.sigmoid(gates[:, 3 * H:4 * H])
        c_new = f_g * c_prev + i_g * g_g
        h_new = o_g * jnp.tanh(c_new)
        # packed-sequence semantics: freeze state / zero output past the length
        valid = lengths > (t0 + tt)
        h_upd = jnp.where(valid, h_new, h_prev)
        c_upd = jnp.where(valid, c_new, c_prev)
        out_ref[tt] = jnp.where(valid, h_new, 0.0).astype(out_ref.dtype)
        return h_upd, c_upd

    h_fin, c_fin = jax.lax.fori_loop(0, t_chunk, step,
                                     (h_scr[...], c_scr[...]), unroll=True)
    h_scr[...] = h_fin
    c_scr[...] = c_fin

    @pl.when(tb == pl.num_programs(1) - 1)
    def _():
        hn_ref[...] = h_fin.astype(hn_ref.dtype)
        cn_ref[...] = c_fin.astype(cn_ref.dtype)


def lstm_packed_pallas(gates_x, lengths, w_hh_t, *, hidden_size, t_chunk=8):
    """Packed-sequence LSTM recurrence over precomputed input projections.

    gates_x : (T, B, 4H) f32 time-major, length-sorted (= x @ W_ih^T + b_ih + b_hh)
    lengths : (B,) int lengths, sorted descending
    w_hh_t  : (H, 4H) f32 recurrent weights (transposed)
    Returns (outputs (T, B, H), h_n (B, H), c_n (B, H)) in the sorted order.
    """
    T, B, G = gates_x.shape
    H = hidden_size
    assert G == 4 * H

    # Pad to vreg / MXU-friendly tiles.
    H_pad = _round_up(H, 128)
    bt = min(_round_up(B, 8), 128)            # batch tile (sublane-aligned)
    B_pad = _round_up(B, bt)
    T_pad = _round_up(T, t_chunk)

    gx = _pad_gate_dim(gates_x, H, H_pad)
    gx = jnp.pad(gx, ((0, T_pad - T), (0, B_pad - B), (0, 0)))

    whh = _pad_gate_dim(w_hh_t, H, H_pad)
    whh = jnp.pad(whh, ((0, H_pad - H), (0, 0))).astype(jnp.bfloat16)

    # Padded batch rows get length 0 -> state stays frozen at zero.
    len_pad = jnp.pad(lengths.astype(jnp.int32), (0, B_pad - B))
    len_b = jnp.broadcast_to(len_pad[:, None], (B_pad, H_pad))

    kernel = functools.partial(_lstm_rec_kernel, hidden_pad=H_pad,
                               t_chunk=t_chunk)

    grid = (B_pad // bt, T_pad // t_chunk)

    out_shapes = (
        jax.ShapeDtypeStruct((T_pad, B_pad, H_pad), jnp.float32),  # outputs
        jax.ShapeDtypeStruct((B_pad, H_pad), jnp.float32),         # h_n
        jax.ShapeDtypeStruct((B_pad, H_pad), jnp.float32),         # c_n
    )

    grid_spec = pltpu.PrefetchScalarGridSpec(
        num_scalar_prefetch=0,
        grid=grid,
        in_specs=[
            pl.BlockSpec((bt, H_pad), lambda i, t: (i, 0)),               # lengths (pre-broadcast)
            pl.BlockSpec((t_chunk, bt, 4 * H_pad), lambda i, t: (t, i, 0)),  # gates_x chunk
            pl.BlockSpec((H_pad, 4 * H_pad), lambda i, t: (0, 0)),        # W_hh^T (bf16)
        ],
        out_specs=(
            pl.BlockSpec((t_chunk, bt, H_pad), lambda i, t: (t, i, 0)),
            pl.BlockSpec((bt, H_pad), lambda i, t: (i, 0)),
            pl.BlockSpec((bt, H_pad), lambda i, t: (i, 0)),
        ),
        scratch_shapes=[
            pltpu.VMEM((bt, H_pad), jnp.float32),   # h state
            pltpu.VMEM((bt, H_pad), jnp.float32),   # c state
        ],
    )

    outs, h_n, c_n = pl.pallas_call(
        kernel,
        out_shape=out_shapes,
        grid_spec=grid_spec,
        compiler_params=pltpu.CompilerParams(
            # batch tiles are independent (megacore-shardable on v7x);
            # the time axis carries the recurrence -> sequential.
            dimension_semantics=("parallel", "arbitrary")),
    )(len_b, gx, whh)

    return outs[:T, :B, :H], h_n[:B, :H], c_n[:B, :H]


def encoder_latent_forward(inp, k, params):
    """Mirrors EncoderLatent.forward(input, k, hidden=None).

    inp: (B, T, D) batch-first float32
    k  : (B,) lengths (1 <= k <= T; max(k) == T so the unpacked output length
         equals T, matching pad_packed_sequence)
    Returns ((h_n, c_n), outputs) with h_n/c_n: (1, B, H) in length-sorted
    order (as in the PyTorch code), outputs: (T, B, H) time-major in the
    original batch order.
    """
    w_ih_t, w_hh_t, bias = params
    H = w_hh_t.shape[0]

    # torch.sort(k, descending=True); torch.index_select(input, 0, indices)
    indices = jnp.argsort(-k)
    k_sorted = k[indices].astype(jnp.int32)
    x_sorted = inp[indices]                                   # (B, T, D)

    # Hoisted input projection: one big parallel matmul for all timesteps
    # (the Pallas kernel only runs the recurrence).
    gates_x = jnp.einsum('btd,dg->tbg', x_sorted, w_ih_t,
                         preferred_element_type=jnp.float32) + bias[None]

    outputs_sorted, h_n, c_n = lstm_packed_pallas(
        gates_x, k_sorted, w_hh_t, hidden_size=H)

    # un-sort outputs back to the original batch order (dim=1, time-major)
    indices_reverse = jnp.argsort(indices)
    outputs = outputs_sorted[:, indices_reverse]

    # hidden_t stays in sorted order, exactly as in the PyTorch code.
    hidden_t = (h_n[None], c_n[None])          # (layers*dirs=1, B, H)
    return hidden_t, outputs


def init_params(key, input_size, hidden_size):
    """Deterministic LSTM params, PyTorch-style uniform(-1/sqrt(H), 1/sqrt(H))."""
    bound = 1.0 / jnp.sqrt(jnp.float32(hidden_size))
    k1, k2, k3, k4 = jax.random.split(key, 4)
    w_ih = jax.random.uniform(k1, (4 * hidden_size, input_size),
                              jnp.float32, -bound, bound)
    w_hh = jax.random.uniform(k2, (4 * hidden_size, hidden_size),
                              jnp.float32, -bound, bound)
    b_ih = jax.random.uniform(k3, (4 * hidden_size,), jnp.float32, -bound, bound)
    b_hh = jax.random.uniform(k4, (4 * hidden_size,), jnp.float32, -bound, bound)
    # kernel layout: transposed weights, combined bias
    return w_ih.T, w_hh.T, (b_ih + b_hh)[None, :]


def _reference_forward(inp, k, params, *, bf16_recurrent=True):
    """Pure-JAX reference (lax.scan).  bf16_recurrent=True mirrors the kernel's
    bf16 MXU operands on the recurrent matmul (f32 accumulation, f32 state)."""
    w_ih_t, w_hh_t, bias = params
    H = w_hh_t.shape[0]
    indices = jnp.argsort(-k)
    k_sorted = k[indices]
    x_tm = jnp.transpose(inp[indices], (1, 0, 2))
    B = x_tm.shape[1]
    whh = w_hh_t.astype(jnp.bfloat16) if bf16_recurrent else w_hh_t

    def step(carry, xt_t):
        h, c = carry
        x_t, t = xt_t
        h_in = h.astype(jnp.bfloat16) if bf16_recurrent else h
        gates = (x_t @ w_ih_t + bias
                 + jnp.dot(h_in, whh, preferred_element_type=jnp.float32))
        i = jax.nn.sigmoid(gates[:, 0 * H:1 * H])
        f = jax.nn.sigmoid(gates[:, 1 * H:2 * H])
        g = jnp.tanh(gates[:, 2 * H:3 * H])
        o = jax.nn.sigmoid(gates[:, 3 * H:4 * H])
        c_new = f * c + i * g
        h_new = o * jnp.tanh(c_new)
        valid = (k_sorted > t)[:, None]
        h = jnp.where(valid, h_new, h)
        c = jnp.where(valid, c_new, c)
        out = jnp.where(valid, h_new, 0.0)
        return (h, c), out

    T = x_tm.shape[0]
    (h_n, c_n), outs = jax.lax.scan(
        step,
        (jnp.zeros((B, H), jnp.float32), jnp.zeros((B, H), jnp.float32)),
        (x_tm, jnp.arange(T)))
    outs = outs[:, jnp.argsort(indices)]
    return (h_n[None], c_n[None]), outs


if __name__ == "__main__":
    B, T, D, H = 4, 8, 16, 32     # batch, seq, latent_vec_size, rnn_size

    key = jax.random.PRNGKey(0)
    k_x, k_p = jax.random.split(key)
    inp = jax.random.normal(k_x, (B, T, D), jnp.float32)
    # lengths: max(k) == T so the unpacked output length equals T
    k = jnp.array([5, 8, 3, 6], dtype=jnp.int32)

    params = init_params(k_p, D, H)

    (h_n, c_n), outputs = jax.jit(encoder_latent_forward)(inp, k, params)
    jax.block_until_ready((h_n, c_n, outputs))

    assert outputs.shape == (T, B, H)
    assert h_n.shape == (1, B, H) and c_n.shape == (1, B, H)

    # correctness check against a matched-precision pure-JAX reference
    (h_ref, c_ref), out_ref = _reference_forward(inp, k, params,
                                                 bf16_recurrent=True)
    assert jnp.allclose(outputs, out_ref, atol=2e-3, rtol=2e-3)
    assert jnp.allclose(h_n, h_ref, atol=2e-3, rtol=2e-3)
    assert jnp.allclose(c_n, c_ref, atol=2e-3, rtol=2e-3)

    # loose sanity check against the exact f32 LSTM (only bf16 MXU rounding)
    (h32, c32), out32 = _reference_forward(inp, k, params,
                                           bf16_recurrent=False)
    assert jnp.allclose(outputs, out32, atol=6e-2, rtol=6e-2)
    assert jnp.allclose(h_n, h32, atol=6e-2, rtol=6e-2)

    print("KERNEL_OK")
</pallas_src>

<mosaic_0001>
module attributes {stable_mosaic.version = 11 : i64} {
  func.func @_lstm_rec_kernel(%arg0: i32, %arg1: i32, %arg2: memref<8x128xi32, #tpu.memory_space<vmem>>, %arg3: memref<8x8x512xf32, #tpu.memory_space<vmem>>, %arg4: memref<128x512xbf16, #tpu.memory_space<vmem>>, %arg5: memref<8x8x128xf32, #tpu.memory_space<vmem>>, %arg6: memref<8x128xf32, #tpu.memory_space<vmem>>, %arg7: memref<8x128xf32, #tpu.memory_space<vmem>>, %arg8: memref<8x128xf32, #tpu.memory_space<vmem>>, %arg9: memref<8x128xf32, #tpu.memory_space<vmem>>) attributes {dimension_semantics = [#tpu.dimension_semantics<parallel>, #tpu.dimension_semantics<arbitrary>], iteration_bounds = array<i64: 1, 1>, scalar_prefetch = 0 : i64, scratch_operands = 2 : i64, tpu.core_type = #tpu.core_type<tc>, window_params = [{transform_indices = @transform_0, window_bounds = array<i64: 8, 128>}, {transform_indices = @transform_1, window_bounds = array<i64: 8, 8, 512>}, {pipeline_mode = #tpu.pipeline_mode<synchronous>, transform_indices = @transform_2, window_bounds = array<i64: 128, 512>}, {transform_indices = @transform_3, window_bounds = array<i64: 8, 8, 128>}, {transform_indices = @transform_4, window_bounds = array<i64: 8, 128>}, {transform_indices = @transform_5, window_bounds = array<i64: 8, 128>}]} {
    %c0_i32 = arith.constant 0 : i32
    %0 = arith.cmpi eq, %arg1, %c0_i32 : i32
    %1 = arith.extui %0 : i1 to i32
    %c0_i32_0 = arith.constant 0 : i32
    %2 = arith.cmpi ne, %1, %c0_i32_0 : i32
    scf.if %2 {
      %cst_87 = arith.constant 0.000000e+00 : f32
      %349 = vector.broadcast %cst_87 : f32 to vector<8x128xf32>
      %c0_88 = arith.constant 0 : index
      %c0_89 = arith.constant 0 : index
      %350 = vector.load %arg8[%c0_88, %c0_89] : memref<8x128xf32, #tpu.memory_space<vmem>>, vector<8x128xf32>
      tpu.vector_store %arg8[%c0_88, %c0_89], %349 {strides = array<i32>} : memref<8x128xf32, #tpu.memory_space<vmem>>, vector<8x128xf32>,
      %cst_90 = arith.constant 0.000000e+00 : f32
      %351 = vector.broadcast %cst_90 : f32 to vector<8x128xf32>
      %c0_91 = arith.constant 0 : index
      %c0_92 = arith.constant 0 : index
      %352 = vector.load %arg9[%c0_91, %c0_92] : memref<8x128xf32, #tpu.memory_space<vmem>>, vector<8x128xf32>
      tpu.vector_store %arg9[%c0_91, %c0_92], %351 {strides = array<i32>} : memref<8x128xf32, #tpu.memory_space<vmem>>, vector<8x128xf32>,
    } else {
    }
    %c0 = arith.constant 0 : index
    %c0_1 = arith.constant 0 : index
    %3 = vector.load %arg2[%c0, %c0_1] : memref<8x128xi32, #tpu.memory_space<vmem>>, vector<8x128xi32>
    %c0_2 = arith.constant 0 : index
    %c0_3 = arith.constant 0 : index
    %4 = vector.load %arg4[%c0_2, %c0_3] : memref<128x512xbf16, #tpu.memory_space<vmem>>, vector<128x512xbf16>
    %c8_i32 = arith.constant 8 : i32
    %5 = arith.muli %arg1, %c8_i32 : i32
    %c0_4 = arith.constant 0 : index
    %c0_5 = arith.constant 0 : index
    %6 = vector.load %arg8[%c0_4, %c0_5] : memref<8x128xf32, #tpu.memory_space<vmem>>, vector<8x128xf32>
    %c0_6 = arith.constant 0 : index
    %c0_7 = arith.constant 0 : index
    %7 = vector.load %arg9[%c0_6, %c0_7] : memref<8x128xf32, #tpu.memory_space<vmem>>, vector<8x128xf32>
    %c0_i32_8 = arith.constant 0 : i32
    %8 = arith.index_cast %c0_i32_8 : i32 to index
    %c0_9 = arith.constant 0 : index
    %c0_10 = arith.constant 0 : index
    %9 = vector.load %arg3[%8, %c0_9, %c0_10] : memref<8x8x512xf32, #tpu.memory_space<vmem>>, vector<1x8x512xf32>
    %10 = vector.shape_cast %9 : vector<1x8x512xf32> to vector<8x512xf32>
    %11 = arith.truncf %6 : vector<8x128xf32> to vector<8x128xbf16>
    %cst = arith.constant dense<0.000000e+00> : vector<8x512xf32>
    %12 = tpu.matmul %11, %4, %cst {dimension_numbers = #tpu.dot_dimension_numbers<[1], [0], [0], [1], [0, 0, 1, 1], [], []>} : vector<8x128xbf16>, vector<128x512xbf16>, vector<8x512xf32> -> vector<8x512xf32>
    %13 = arith.addf %10, %12 : vector<8x512xf32>
    %14 = vector.extract_strided_slice %13 {offsets = [0, 0], sizes = [8, 128], strides = [1, 1]} : vector<8x512xf32> to vector<8x128xf32>
    %15 = arith.negf %14 : vector<8x128xf32>
    %16 = math.exp %15 : vector<8x128xf32>
    %cst_11 = arith.constant 1.000000e+00 : f32
    %17 = vector.broadcast %cst_11 : f32 to vector<8x128xf32>
    %18 = arith.addf %17, %16 : vector<8x128xf32>
    %19 = arith.divf %17, %18 : vector<8x128xf32>
    %20 = vector.extract_strided_slice %13 {offsets = [0, 128], sizes = [8, 128], strides = [1, 1]} : vector<8x512xf32> to vector<8x128xf32>
    %21 = arith.negf %20 : vector<8x128xf32>
    %22 = math.exp %21 : vector<8x128xf32>
    %cst_12 = arith.constant 1.000000e+00 : f32
    %23 = vector.broadcast %cst_12 : f32 to vector<8x128xf32>
    %24 = arith.addf %23, %22 : vector<8x128xf32>
    %25 = arith.divf %23, %24 : vector<8x128xf32>
    %26 = vector.extract_strided_slice %13 {offsets = [0, 256], sizes = [8, 128], strides = [1, 1]} : vector<8x512xf32> to vector<8x128xf32>
    %27 = math.tanh %26 : vector<8x128xf32>
    %28 = vector.extract_strided_slice %13 {offsets = [0, 384], sizes = [8, 128], strides = [1, 1]} : vector<8x512xf32> to vector<8x128xf32>
    %29 = arith.negf %28 : vector<8x128xf32>
    %30 = math.exp %29 : vector<8x128xf32>
    %cst_13 = arith.constant 1.000000e+00 : f32
    %31 = vector.broadcast %cst_13 : f32 to vector<8x128xf32>
    %32 = arith.addf %31, %30 : vector<8x128xf32>
    %33 = arith.divf %31, %32 : vector<8x128xf32>
    %34 = arith.mulf %25, %7 : vector<8x128xf32>
    %35 = arith.mulf %19, %27 : vector<8x128xf32>
    %36 = arith.addf %34, %35 : vector<8x128xf32>
    %37 = math.tanh %36 : vector<8x128xf32>
    %38 = arith.mulf %33, %37 : vector<8x128xf32>
    %39 = arith.addi %5, %c0_i32_8 : i32
    %40 = vector.broadcast %39 : i32 to vector<8x128xi32>
    %41 = arith.cmpi sgt, %3, %40 : vector<8x128xi32>
    %42 = arith.select %41, %38, %6 : vector<8x128xi1>, vector<8x128xf32>
    %43 = arith.select %41, %36, %7 : vector<8x128xi1>, vector<8x128xf32>
    %cst_14 = arith.constant 0.000000e+00 : f32
    %44 = vector.broadcast %cst_14 : f32 to vector<8x128xf32>
    %45 = arith.select %41, %38, %44 : vector<8x128xi1>, vector<8x128xf32>
    %46 = arith.index_cast %c0_i32_8 : i32 to index
    %c0_15 = arith.constant 0 : index
    %c0_16 = arith.constant 0 : index
    %47 = vector.load %arg5[%46, %c0_15, %c0_16] : memref<8x8x128xf32, #tpu.memory_space<vmem>>, vector<1x8x128xf32>
    %48 = vector.shape_cast %47 : vector<1x8x128xf32> to vector<8x128xf32>
    %49 = vector.shape_cast %45 : vector<8x128xf32> to vector<1x8x128xf32>
    tpu.vector_store %arg5[%46, %c0_15, %c0_16], %49 {strides = array<i32>} : memref<8x8x128xf32, #tpu.memory_space<vmem>>, vector<1x8x128xf32>,
    %c1_i32 = arith.constant 1 : i32
    %50 = arith.index_cast %c1_i32 : i32 to index
    %c0_17 = arith.constant 0 : index
    %c0_18 = arith.constant 0 : index
    %51 = vector.load %arg3[%50, %c0_17, %c0_18] : memref<8x8x512xf32, #tpu.memory_space<vmem>>, vector<1x8x512xf32>
    %52 = vector.shape_cast %51 : vector<1x8x512xf32> to vector<8x512xf32>
    %53 = arith.truncf %42 : vector<8x128xf32> to vector<8x128xbf16>
    %cst_19 = arith.constant dense<0.000000e+00> : vector<8x512xf32>
    %54 = tpu.matmul %53, %4, %cst_19 {dimension_numbers = #tpu.dot_dimension_numbers<[1], [0], [0], [1], [0, 0, 1, 1], [], []>} : vector<8x128xbf16>, vector<128x512xbf16>, vector<8x512xf32> -> vector<8x512xf32>
    %55 = arith.addf %52, %54 : vector<8x512xf32>
    %56 = vector.extract_strided_slice %55 {offsets = [0, 0], sizes = [8, 128], strides = [1, 1]} : vector<8x512xf32> to vector<8x128xf32>
    %57 = arith.negf %56 : vector<8x128xf32>
    %58 = math.exp %57 : vector<8x128xf32>
    %cst_20 = arith.constant 1.000000e+00 : f32
    %59 = vector.broadcast %cst_20 : f32 to vector<8x128xf32>
    %60 = arith.addf %59, %58 : vector<8x128xf32>
    %61 = arith.divf %59, %60 : vector<8x128xf32>
    %62 = vector.extract_strided_slice %55 {offsets = [0, 128], sizes = [8, 128], strides = [1, 1]} : vector<8x512xf32> to vector<8x128xf32>
    %63 = arith.negf %62 : vector<8x128xf32>
    %64 = math.exp %63 : vector<8x128xf32>
    %cst_21 = arith.constant 1.000000e+00 : f32
    %65 = vector.broadcast %cst_21 : f32 to vector<8x128xf32>
    %66 = arith.addf %65, %64 : vector<8x128xf32>
    %67 = arith.divf %65, %66 : vector<8x128xf32>
    %68 = vector.extract_strided_slice %55 {offsets = [0, 256], sizes = [8, 128], strides = [1, 1]} : vector<8x512xf32> to vector<8x128xf32>
    %69 = math.tanh %68 : vector<8x128xf32>
    %70 = vector.extract_strided_slice %55 {offsets = [0, 384], sizes = [8, 128], strides = [1, 1]} : vector<8x512xf32> to vector<8x128xf32>
    %71 = arith.negf %70 : vector<8x128xf32>
    %72 = math.exp %71 : vector<8x128xf32>
    %cst_22 = arith.constant 1.000000e+00 : f32
    %73 = vector.broadcast %cst_22 : f32 to vector<8x128xf32>
    %74 = arith.addf %73, %72 : vector<8x128xf32>
    %75 = arith.divf %73, %74 : vector<8x128xf32>
    %76 = arith.mulf %67, %43 : vector<8x128xf32>
    %77 = arith.mulf %61, %69 : vector<8x128xf32>
    %78 = arith.addf %76, %77 : vector<8x128xf32>
    %79 = math.tanh %78 : vector<8x128xf32>
    %80 = arith.mulf %75, %79 : vector<8x128xf32>
    %81 = arith.addi %5, %c1_i32 : i32
    %82 = vector.broadcast %81 : i32 to vector<8x128xi32>
    %83 = arith.cmpi sgt, %3, %82 : vector<8x128xi32>
    %84 = arith.select %83, %80, %42 : vector<8x128xi1>, vector<8x128xf32>
    %85 = arith.select %83, %78, %43 : vector<8x128xi1>, vector<8x128xf32>
    %cst_23 = arith.constant 0.000000e+00 : f32
    %86 = vector.broadcast %cst_23 : f32 to vector<8x128xf32>
    %87 = arith.select %83, %80, %86 : vector<8x128xi1>, vector<8x128xf32>
    %88 = arith.index_cast %c1_i32 : i32 to index
    %c0_24 = arith.constant 0 : index
    %c0_25 = arith.constant 0 : index
    %89 = vector.load %arg5[%88, %c0_24, %c0_25] : memref<8x8x128xf32, #tpu.memory_space<vmem>>, vector<1x8x128xf32>
    %90 = vector.shape_cast %89 : vector<1x8x128xf32> to vector<8x128xf32>
    %91 = vector.shape_cast %87 : vector<8x128xf32> to vector<1x8x128xf32>
    tpu.vector_store %arg5[%88, %c0_24, %c0_25], %91 {strides = array<i32>} : memref<8x8x128xf32, #tpu.memory_space<vmem>>, vector<1x8x128xf32>,
    %c2_i32 = arith.constant 2 : i32
    %92 = arith.index_cast %c2_i32 : i32 to index
    %c0_26 = arith.constant 0 : index
    %c0_27 = arith.constant 0 : index
    %93 = vector.load %arg3[%92, %c0_26, %c0_27] : memref<8x8x512xf32, #tpu.memory_space<vmem>>, vector<1x8x512xf32>
    %94 = vector.shape_cast %93 : vector<1x8x512xf32> to vector<8x512xf32>
    %95 = arith.truncf %84 : vector<8x128xf32> to vector<8x128xbf16>
    %cst_28 = arith.constant dense<0.000000e+00> : vector<8x512xf32>
    %96 = tpu.matmul %95, %4, %cst_28 {dimension_numbers = #tpu.dot_dimension_numbers<[1], [0], [0], [1], [0, 0, 1, 1], [], []>} : vector<8x128xbf16>, vector<128x512xbf16>, vector<8x512xf32> -> vector<8x512xf32>
    %97 = arith.addf %94, %96 : vector<8x512xf32>
    %98 = vector.extract_strided_slice %97 {offsets = [0, 0], sizes = [8, 128], strides = [1, 1]} : vector<8x512xf32> to vector<8x128xf32>
    %99 = arith.negf %98 : vector<8x128xf32>
    %100 = math.exp %99 : vector<8x128xf32>
    %cst_29 = arith.constant 1.000000e+00 : f32
    %101 = vector.broadcast %cst_29 : f32 to vector<8x128xf32>
    %102 = arith.addf %101, %100 : vector<8x128xf32>
    %103 = arith.divf %101, %102 : vector<8x128xf32>
    %104 = vector.extract_strided_slice %97 {offsets = [0, 128], sizes = [8, 128], strides = [1, 1]} : vector<8x512xf32> to vector<8x128xf32>
    %105 = arith.negf %104 : vector<8x128xf32>
    %106 = math.exp %105 : vector<8x128xf32>
    %cst_30 = arith.constant 1.000000e+00 : f32
    %107 = vector.broadcast %cst_30 : f32 to vector<8x128xf32>
    %108 = arith.addf %107, %106 : vector<8x128xf32>
    %109 = arith.divf %107, %108 : vector<8x128xf32>
    %110 = vector.extract_strided_slice %97 {offsets = [0, 256], sizes = [8, 128], strides = [1, 1]} : vector<8x512xf32> to vector<8x128xf32>
    %111 = math.tanh %110 : vector<8x128xf32>
    %112 = vector.extract_strided_slice %97 {offsets = [0, 384], sizes = [8, 128], strides = [1, 1]} : vector<8x512xf32> to vector<8x128xf32>
    %113 = arith.negf %112 : vector<8x128xf32>
    %114 = math.exp %113 : vector<8x128xf32>
    %cst_31 = arith.constant 1.000000e+00 : f32
    %115 = vector.broadcast %cst_31 : f32 to vector<8x128xf32>
    %116 = arith.addf %115, %114 : vector<8x128xf32>
    %117 = arith.divf %115, %116 : vector<8x128xf32>
    %118 = arith.mulf %109, %85 : vector<8x128xf32>
    %119 = arith.mulf %103, %111 : vector<8x128xf32>
    %120 = arith.addf %118, %119 : vector<8x128xf32>
    %121 = math.tanh %120 : vector<8x128xf32>
    %122 = arith.mulf %117, %121 : vector<8x128xf32>
    %123 = arith.addi %5, %c2_i32 : i32
    %124 = vector.broadcast %123 : i32 to vector<8x128xi32>
    %125 = arith.cmpi sgt, %3, %124 : vector<8x128xi32>
    %126 = arith.select %125, %122, %84 : vector<8x128xi1>, vector<8x128xf32>
    %127 = arith.select %125, %120, %85 : vector<8x128xi1>, vector<8x128xf32>
    %cst_32 = arith.constant 0.000000e+00 : f32
    %128 = vector.broadcast %cst_32 : f32 to vector<8x128xf32>
    %129 = arith.select %125, %122, %128 : vector<8x128xi1>, vector<8x128xf32>
    %130 = arith.index_cast %c2_i32 : i32 to index
    %c0_33 = arith.constant 0 : index
    %c0_34 = arith.constant 0 : index
    %131 = vector.load %arg5[%130, %c0_33, %c0_34] : memref<8x8x128xf32, #tpu.memory_space<vmem>>, vector<1x8x128xf32>
    %132 = vector.shape_cast %131 : vector<1x8x128xf32> to vector<8x128xf32>
    %133 = vector.shape_cast %129 : vector<8x128xf32> to vector<1x8x128xf32>
    tpu.vector_store %arg5[%130, %c0_33, %c0_34], %133 {strides = array<i32>} : memref<8x8x128xf32, #tpu.memory_space<vmem>>, vector<1x8x128xf32>,
    %c3_i32 = arith.constant 3 : i32
    %134 = arith.index_cast %c3_i32 : i32 to index
    %c0_35 = arith.constant 0 : index
    %c0_36 = arith.constant 0 : index
    %135 = vector.load %arg3[%134, %c0_35, %c0_36] : memref<8x8x512xf32, #tpu.memory_space<vmem>>, vector<1x8x512xf32>
    %136 = vector.shape_cast %135 : vector<1x8x512xf32> to vector<8x512xf32>
    %137 = arith.truncf %126 : vector<8x128xf32> to vector<8x128xbf16>
    %cst_37 = arith.constant dense<0.000000e+00> : vector<8x512xf32>
    %138 = tpu.matmul %137, %4, %cst_37 {dimension_numbers = #tpu.dot_dimension_numbers<[1], [0], [0], [1], [0, 0, 1, 1], [], []>} : vector<8x128xbf16>, vector<128x512xbf16>, vector<8x512xf32> -> vector<8x512xf32>
    %139 = arith.addf %136, %138 : vector<8x512xf32>
    %140 = vector.extract_strided_slice %139 {offsets = [0, 0], sizes = [8, 128], strides = [1, 1]} : vector<8x512xf32> to vector<8x128xf32>
    %141 = arith.negf %140 : vector<8x128xf32>
    %142 = math.exp %141 : vector<8x128xf32>
    %cst_38 = arith.constant 1.000000e+00 : f32
    %143 = vector.broadcast %cst_38 : f32 to vector<8x128xf32>
    %144 = arith.addf %143, %142 : vector<8x128xf32>
    %145 = arith.divf %143, %144 : vector<8x128xf32>
    %146 = vector.extract_strided_slice %139 {offsets = [0, 128], sizes = [8, 128], strides = [1, 1]} : vector<8x512xf32> to vector<8x128xf32>
    %147 = arith.negf %146 : vector<8x128xf32>
    %148 = math.exp %147 : vector<8x128xf32>
    %cst_39 = arith.constant 1.000000e+00 : f32
    %149 = vector.broadcast %cst_39 : f32 to vector<8x128xf32>
    %150 = arith.addf %149, %148 : vector<8x128xf32>
    %151 = arith.divf %149, %150 : vector<8x128xf32>
    %152 = vector.extract_strided_slice %139 {offsets = [0, 256], sizes = [8, 128], strides = [1, 1]} : vector<8x512xf32> to vector<8x128xf32>
    %153 = math.tanh %152 : vector<8x128xf32>
    %154 = vector.extract_strided_slice %139 {offsets = [0, 384], sizes = [8, 128], strides = [1, 1]} : vector<8x512xf32> to vector<8x128xf32>
    %155 = arith.negf %154 : vector<8x128xf32>
    %156 = math.exp %155 : vector<8x128xf32>
    %cst_40 = arith.constant 1.000000e+00 : f32
    %157 = vector.broadcast %cst_40 : f32 to vector<8x128xf32>
    %158 = arith.addf %157, %156 : vector<8x128xf32>
    %159 = arith.divf %157, %158 : vector<8x128xf32>
    %160 = arith.mulf %151, %127 : vector<8x128xf32>
    %161 = arith.mulf %145, %153 : vector<8x128xf32>
    %162 = arith.addf %160, %161 : vector<8x128xf32>
    %163 = math.tanh %162 : vector<8x128xf32>
    %164 = arith.mulf %159, %163 : vector<8x128xf32>
    %165 = arith.addi %5, %c3_i32 : i32
    %166 = vector.broadcast %165 : i32 to vector<8x128xi32>
    %167 = arith.cmpi sgt, %3, %166 : vector<8x128xi32>
    %168 = arith.select %167, %164, %126 : vector<8x128xi1>, vector<8x128xf32>
    %169 = arith.select %167, %162, %127 : vector<8x128xi1>, vector<8x128xf32>
    %cst_41 = arith.constant 0.000000e+00 : f32
    %170 = vector.broadcast %cst_41 : f32 to vector<8x128xf32>
    %171 = arith.select %167, %164, %170 : vector<8x128xi1>, vector<8x128xf32>
    %172 = arith.index_cast %c3_i32 : i32 to index
    %c0_42 = arith.constant 0 : index
    %c0_43 = arith.constant 0 : index
    %173 = vector.load %arg5[%172, %c0_42, %c0_43] : memref<8x8x128xf32, #tpu.memory_space<vmem>>, vector<1x8x128xf32>
    %174 = vector.shape_cast %173 : vector<1x8x128xf32> to vector<8x128xf32>
    %175 = vector.shape_cast %171 : vector<8x128xf32> to vector<1x8x128xf32>
    tpu.vector_store %arg5[%172, %c0_42, %c0_43], %175 {strides = array<i32>} : memref<8x8x128xf32, #tpu.memory_space<vmem>>, vector<1x8x128xf32>,
    %c4_i32 = arith.constant 4 : i32
    %176 = arith.index_cast %c4_i32 : i32 to index
    %c0_44 = arith.constant 0 : index
    %c0_45 = arith.constant 0 : index
    %177 = vector.load %arg3[%176, %c0_44, %c0_45] : memref<8x8x512xf32, #tpu.memory_space<vmem>>, vector<1x8x512xf32>
    %178 = vector.shape_cast %177 : vector<1x8x512xf32> to vector<8x512xf32>
    %179 = arith.truncf %168 : vector<8x128xf32> to vector<8x128xbf16>
    %cst_46 = arith.constant dense<0.000000e+00> : vector<8x512xf32>
    %180 = tpu.matmul %179, %4, %cst_46 {dimension_numbers = #tpu.dot_dimension_numbers<[1], [0], [0], [1], [0, 0, 1, 1], [], []>} : vector<8x128xbf16>, vector<128x512xbf16>, vector<8x512xf32> -> vector<8x512xf32>
    %181 = arith.addf %178, %180 : vector<8x512xf32>
    %182 = vector.extract_strided_slice %181 {offsets = [0, 0], sizes = [8, 128], strides = [1, 1]} : vector<8x512xf32> to vector<8x128xf32>
    %183 = arith.negf %182 : vector<8x128xf32>
    %184 = math.exp %183 : vector<8x128xf32>
    %cst_47 = arith.constant 1.000000e+00 : f32
    %185 = vector.broadcast %cst_47 : f32 to vector<8x128xf32>
    %186 = arith.addf %185, %184 : vector<8x128xf32>
    %187 = arith.divf %185, %186 : vector<8x128xf32>
    %188 = vector.extract_strided_slice %181 {offsets = [0, 128], sizes = [8, 128], strides = [1, 1]} : vector<8x512xf32> to vector<8x128xf32>
    %189 = arith.negf %188 : vector<8x128xf32>
    %190 = math.exp %189 : vector<8x128xf32>
    %cst_48 = arith.constant 1.000000e+00 : f32
    %191 = vector.broadcast %cst_48 : f32 to vector<8x128xf32>
    %192 = arith.addf %191, %190 : vector<8x128xf32>
    %193 = arith.divf %191, %192 : vector<8x128xf32>
    %194 = vector.extract_strided_slice %181 {offsets = [0, 256], sizes = [8, 128], strides = [1, 1]} : vector<8x512xf32> to vector<8x128xf32>
    %195 = math.tanh %194 : vector<8x128xf32>
    %196 = vector.extract_strided_slice %181 {offsets = [0, 384], sizes = [8, 128], strides = [1, 1]} : vector<8x512xf32> to vector<8x128xf32>
    %197 = arith.negf %196 : vector<8x128xf32>
    %198 = math.exp %197 : vector<8x128xf32>
    %cst_49 = arith.constant 1.000000e+00 : f32
    %199 = vector.broadcast %cst_49 : f32 to vector<8x128xf32>
    %200 = arith.addf %199, %198 : vector<8x128xf32>
    %201 = arith.divf %199, %200 : vector<8x128xf32>
    %202 = arith.mulf %193, %169 : vector<8x128xf32>
    %203 = arith.mulf %187, %195 : vector<8x128xf32>
    %204 = arith.addf %202, %203 : vector<8x128xf32>
    %205 = math.tanh %204 : vector<8x128xf32>
    %206 = arith.mulf %201, %205 : vector<8x128xf32>
    %207 = arith.addi %5, %c4_i32 : i32
    %208 = vector.broadcast %207 : i32 to vector<8x128xi32>
    %209 = arith.cmpi sgt, %3, %208 : vector<8x128xi32>
    %210 = arith.select %209, %206, %168 : vector<8x128xi1>, vector<8x128xf32>
    %211 = arith.select %209, %204, %169 : vector<8x128xi1>, vector<8x128xf32>
    %cst_50 = arith.constant 0.000000e+00 : f32
    %212 = vector.broadcast %cst_50 : f32 to vector<8x128xf32>
    %213 = arith.select %209, %206, %212 : vector<8x128xi1>, vector<8x128xf32>
    %214 = arith.index_cast %c4_i32 : i32 to index
    %c0_51 = arith.constant 0 : index
    %c0_52 = arith.constant 0 : index
    %215 = vector.load %arg5[%214, %c0_51, %c0_52] : memref<8x8x128xf32, #tpu.memory_space<vmem>>, vector<1x8x128xf32>
    %216 = vector.shape_cast %215 : vector<1x8x128xf32> to vector<8x128xf32>
    %217 = vector.shape_cast %213 : vector<8x128xf32> to vector<1x8x128xf32>
    tpu.vector_store %arg5[%214, %c0_51, %c0_52], %217 {strides = array<i32>} : memref<8x8x128xf32, #tpu.memory_space<vmem>>, vector<1x8x128xf32>,
    %c5_i32 = arith.constant 5 : i32
    %218 = arith.index_cast %c5_i32 : i32 to index
    %c0_53 = arith.constant 0 : index
    %c0_54 = arith.constant 0 : index
    %219 = vector.load %arg3[%218, %c0_53, %c0_54] : memref<8x8x512xf32, #tpu.memory_space<vmem>>, vector<1x8x512xf32>
    %220 = vector.shape_cast %219 : vector<1x8x512xf32> to vector<8x512xf32>
    %221 = arith.truncf %210 : vector<8x128xf32> to vector<8x128xbf16>
    %cst_55 = arith.constant dense<0.000000e+00> : vector<8x512xf32>
    %222 = tpu.matmul %221, %4, %cst_55 {dimension_numbers = #tpu.dot_dimension_numbers<[1], [0], [0], [1], [0, 0, 1, 1], [], []>} : vector<8x128xbf16>, vector<128x512xbf16>, vector<8x512xf32> -> vector<8x512xf32>
    %223 = arith.addf %220, %222 : vector<8x512xf32>
    %224 = vector.extract_strided_slice %223 {offsets = [0, 0], sizes = [8, 128], strides = [1, 1]} : vector<8x512xf32> to vector<8x128xf32>
    %225 = arith.negf %224 : vector<8x128xf32>
    %226 = math.exp %225 : vector<8x128xf32>
    %cst_56 = arith.constant 1.000000e+00 : f32
    %227 = vector.broadcast %cst_56 : f32 to vector<8x128xf32>
    %228 = arith.addf %227, %226 : vector<8x128xf32>
    %229 = arith.divf %227, %228 : vector<8x128xf32>
    %230 = vector.extract_strided_slice %223 {offsets = [0, 128], sizes = [8, 128], strides = [1, 1]} : vector<8x512xf32> to vector<8x128xf32>
    %231 = arith.negf %230 : vector<8x128xf32>
    %232 = math.exp %231 : vector<8x128xf32>
    %cst_57 = arith.constant 1.000000e+00 : f32
    %233 = vector.broadcast %cst_57 : f32 to vector<8x128xf32>
    %234 = arith.addf %233, %232 : vector<8x128xf32>
    %235 = arith.divf %233, %234 : vector<8x128xf32>
    %236 = vector.extract_strided_slice %223 {offsets = [0, 256], sizes = [8, 128], strides = [1, 1]} : vector<8x512xf32> to vector<8x128xf32>
    %237 = math.tanh %236 : vector<8x128xf32>
    %238 = vector.extract_strided_slice %223 {offsets = [0, 384], sizes = [8, 128], strides = [1, 1]} : vector<8x512xf32> to vector<8x128xf32>
    %239 = arith.negf %238 : vector<8x128xf32>
    %240 = math.exp %239 : vector<8x128xf32>
    %cst_58 = arith.constant 1.000000e+00 : f32
    %241 = vector.broadcast %cst_58 : f32 to vector<8x128xf32>
    %242 = arith.addf %241, %240 : vector<8x128xf32>
    %243 = arith.divf %241, %242 : vector<8x128xf32>
    %244 = arith.mulf %235, %211 : vector<8x128xf32>
    %245 = arith.mulf %229, %237 : vector<8x128xf32>
    %246 = arith.addf %244, %245 : vector<8x128xf32>
    %247 = math.tanh %246 : vector<8x128xf32>
    %248 = arith.mulf %243, %247 : vector<8x128xf32>
    %249 = arith.addi %5, %c5_i32 : i32
    %250 = vector.broadcast %249 : i32 to vector<8x128xi32>
    %251 = arith.cmpi sgt, %3, %250 : vector<8x128xi32>
    %252 = arith.select %251, %248, %210 : vector<8x128xi1>, vector<8x128xf32>
    %253 = arith.select %251, %246, %211 : vector<8x128xi1>, vector<8x128xf32>
    %cst_59 = arith.constant 0.000000e+00 : f32
    %254 = vector.broadcast %cst_59 : f32 to vector<8x128xf32>
    %255 = arith.select %251, %248, %254 : vector<8x128xi1>, vector<8x128xf32>
    %256 = arith.index_cast %c5_i32 : i32 to index
    %c0_60 = arith.constant 0 : index
    %c0_61 = arith.constant 0 : index
    %257 = vector.load %arg5[%256, %c0_60, %c0_61] : memref<8x8x128xf32, #tpu.memory_space<vmem>>, vector<1x8x128xf32>
    %258 = vector.shape_cast %257 : vector<1x8x128xf32> to vector<8x128xf32>
    %259 = vector.shape_cast %255 : vector<8x128xf32> to vector<1x8x128xf32>
    tpu.vector_store %arg5[%256, %c0_60, %c0_61], %259 {strides = array<i32>} : memref<8x8x128xf32, #tpu.memory_space<vmem>>, vector<1x8x128xf32>,
    %c6_i32 = arith.constant 6 : i32
    %260 = arith.index_cast %c6_i32 : i32 to index
    %c0_62 = arith.constant 0 : index
    %c0_63 = arith.constant 0 : index
    %261 = vector.load %arg3[%260, %c0_62, %c0_63] : memref<8x8x512xf32, #tpu.memory_space<vmem>>, vector<1x8x512xf32>
    %262 = vector.shape_cast %261 : vector<1x8x512xf32> to vector<8x512xf32>
    %263 = arith.truncf %252 : vector<8x128xf32> to vector<8x128xbf16>
    %cst_64 = arith.constant dense<0.000000e+00> : vector<8x512xf32>
    %264 = tpu.matmul %263, %4, %cst_64 {dimension_numbers = #tpu.dot_dimension_numbers<[1], [0], [0], [1], [0, 0, 1, 1], [], []>} : vector<8x128xbf16>, vector<128x512xbf16>, vector<8x512xf32> -> vector<8x512xf32>
    %265 = arith.addf %262, %264 : vector<8x512xf32>
    %266 = vector.extract_strided_slice %265 {offsets = [0, 0], sizes = [8, 128], strides = [1, 1]} : vector<8x512xf32> to vector<8x128xf32>
    %267 = arith.negf %266 : vector<8x128xf32>
    %268 = math.exp %267 : vector<8x128xf32>
    %cst_65 = arith.constant 1.000000e+00 : f32
    %269 = vector.broadcast %cst_65 : f32 to vector<8x128xf32>
    %270 = arith.addf %269, %268 : vector<8x128xf32>
    %271 = arith.divf %269, %270 : vector<8x128xf32>
    %272 = vector.extract_strided_slice %265 {offsets = [0, 128], sizes = [8, 128], strides = [1, 1]} : vector<8x512xf32> to vector<8x128xf32>
    %273 = arith.negf %272 : vector<8x128xf32>
    %274 = math.exp %273 : vector<8x128xf32>
    %cst_66 = arith.constant 1.000000e+00 : f32
    %275 = vector.broadcast %cst_66 : f32 to vector<8x128xf32>
    %276 = arith.addf %275, %274 : vector<8x128xf32>
    %277 = arith.divf %275, %276 : vector<8x128xf32>
    %278 = vector.extract_strided_slice %265 {offsets = [0, 256], sizes = [8, 128], strides = [1, 1]} : vector<8x512xf32> to vector<8x128xf32>
    %279 = math.tanh %278 : vector<8x128xf32>
    %280 = vector.extract_strided_slice %265 {offsets = [0, 384], sizes = [8, 128], strides = [1, 1]} : vector<8x512xf32> to vector<8x128xf32>
    %281 = arith.negf %280 : vector<8x128xf32>
    %282 = math.exp %281 : vector<8x128xf32>
    %cst_67 = arith.constant 1.000000e+00 : f32
    %283 = vector.broadcast %cst_67 : f32 to vector<8x128xf32>
    %284 = arith.addf %283, %282 : vector<8x128xf32>
    %285 = arith.divf %283, %284 : vector<8x128xf32>
    %286 = arith.mulf %277, %253 : vector<8x128xf32>
    %287 = arith.mulf %271, %279 : vector<8x128xf32>
    %288 = arith.addf %286, %287 : vector<8x128xf32>
    %289 = math.tanh %288 : vector<8x128xf32>
    %290 = arith.mulf %285, %289 : vector<8x128xf32>
    %291 = arith.addi %5, %c6_i32 : i32
    %292 = vector.broadcast %291 : i32 to vector<8x128xi32>
    %293 = arith.cmpi sgt, %3, %292 : vector<8x128xi32>
    %294 = arith.select %293, %290, %252 : vector<8x128xi1>, vector<8x128xf32>
    %295 = arith.select %293, %288, %253 : vector<8x128xi1>, vector<8x128xf32>
    %cst_68 = arith.constant 0.000000e+00 : f32
    %296 = vector.broadcast %cst_68 : f32 to vector<8x128xf32>
    %297 = arith.select %293, %290, %296 : vector<8x128xi1>, vector<8x128xf32>
    %298 = arith.index_cast %c6_i32 : i32 to index
    %c0_69 = arith.constant 0 : index
    %c0_70 = arith.constant 0 : index
    %299 = vector.load %arg5[%298, %c0_69, %c0_70] : memref<8x8x128xf32, #tpu.memory_space<vmem>>, vector<1x8x128xf32>
    %300 = vector.shape_cast %299 : vector<1x8x128xf32> to vector<8x128xf32>
    %301 = vector.shape_cast %297 : vector<8x128xf32> to vector<1x8x128xf32>
    tpu.vector_store %arg5[%298, %c0_69, %c0_70], %301 {strides = array<i32>} : memref<8x8x128xf32, #tpu.memory_space<vmem>>, vector<1x8x128xf32>,
    %c7_i32 = arith.constant 7 : i32
    %302 = arith.index_cast %c7_i32 : i32 to index
    %c0_71 = arith.constant 0 : index
    %c0_72 = arith.constant 0 : index
    %303 = vector.load %arg3[%302, %c0_71, %c0_72] : memref<8x8x512xf32, #tpu.memory_space<vmem>>, vector<1x8x512xf32>
    %304 = vector.shape_cast %303 : vector<1x8x512xf32> to vector<8x512xf32>
    %305 = arith.truncf %294 : vector<8x128xf32> to vector<8x128xbf16>
    %cst_73 = arith.constant dense<0.000000e+00> : vector<8x512xf32>
    %306 = tpu.matmul %305, %4, %cst_73 {dimension_numbers = #tpu.dot_dimension_numbers<[1], [0], [0], [1], [0, 0, 1, 1], [], []>} : vector<8x128xbf16>, vector<128x512xbf16>, vector<8x512xf32> -> vector<8x512xf32>
    %307 = arith.addf %304, %306 : vector<8x512xf32>
    %308 = vector.extract_strided_slice %307 {offsets = [0, 0], sizes = [8, 128], strides = [1, 1]} : vector<8x512xf32> to vector<8x128xf32>
    %309 = arith.negf %308 : vector<8x128xf32>
    %310 = math.exp %309 : vector<8x128xf32>
    %cst_74 = arith.constant 1.000000e+00 : f32
    %311 = vector.broadcast %cst_74 : f32 to vector<8x128xf32>
    %312 = arith.addf %311, %310 : vector<8x128xf32>
    %313 = arith.divf %311, %312 : vector<8x128xf32>
    %314 = vector.extract_strided_slice %307 {offsets = [0, 128], sizes = [8, 128], strides = [1, 1]} : vector<8x512xf32> to vector<8x128xf32>
    %315 = arith.negf %314 : vector<8x128xf32>
    %316 = math.exp %315 : vector<8x128xf32>
    %cst_75 = arith.constant 1.000000e+00 : f32
    %317 = vector.broadcast %cst_75 : f32 to vector<8x128xf32>
    %318 = arith.addf %317, %316 : vector<8x128xf32>
    %319 = arith.divf %317, %318 : vector<8x128xf32>
    %320 = vector.extract_strided_slice %307 {offsets = [0, 256], sizes = [8, 128], strides = [1, 1]} : vector<8x512xf32> to vector<8x128xf32>
    %321 = math.tanh %320 : vector<8x128xf32>
    %322 = vector.extract_strided_slice %307 {offsets = [0, 384], sizes = [8, 128], strides = [1, 1]} : vector<8x512xf32> to vector<8x128xf32>
    %323 = arith.negf %322 : vector<8x128xf32>
    %324 = math.exp %323 : vector<8x128xf32>
    %cst_76 = arith.constant 1.000000e+00 : f32
    %325 = vector.broadcast %cst_76 : f32 to vector<8x128xf32>
    %326 = arith.addf %325, %324 : vector<8x128xf32>
    %327 = arith.divf %325, %326 : vector<8x128xf32>
    %328 = arith.mulf %319, %295 : vector<8x128xf32>
    %329 = arith.mulf %313, %321 : vector<8x128xf32>
    %330 = arith.addf %328, %329 : vector<8x128xf32>
    %331 = math.tanh %330 : vector<8x128xf32>
    %332 = arith.mulf %327, %331 : vector<8x128xf32>
    %333 = arith.addi %5, %c7_i32 : i32
    %334 = vector.broadcast %333 : i32 to vector<8x128xi32>
    %335 = arith.cmpi sgt, %3, %334 : vector<8x128xi32>
    %336 = arith.select %335, %332, %294 : vector<8x128xi1>, vector<8x128xf32>
    %337 = arith.select %335, %330, %295 : vector<8x128xi1>, vector<8x128xf32>
    %cst_77 = arith.constant 0.000000e+00 : f32
    %338 = vector.broadcast %cst_77 : f32 to vector<8x128xf32>
    %339 = arith.select %335, %332, %338 : vector<8x128xi1>, vector<8x128xf32>
    %340 = arith.index_cast %c7_i32 : i32 to index
    %c0_78 = arith.constant 0 : index
    %c0_79 = arith.constant 0 : index
    %341 = vector.load %arg5[%340, %c0_78, %c0_79] : memref<8x8x128xf32, #tpu.memory_space<vmem>>, vector<1x8x128xf32>
    %342 = vector.shape_cast %341 : vector<1x8x128xf32> to vector<8x128xf32>
    %343 = vector.shape_cast %339 : vector<8x128xf32> to vector<1x8x128xf32>
    tpu.vector_store %arg5[%340, %c0_78, %c0_79], %343 {strides = array<i32>} : memref<8x8x128xf32, #tpu.memory_space<vmem>>, vector<1x8x128xf32>,
    %c8_i32_80 = arith.constant 8 : i32
    %c0_81 = arith.constant 0 : index
    %c0_82 = arith.constant 0 : index
    %344 = vector.load %arg8[%c0_81, %c0_82] : memref<8x128xf32, #tpu.memory_space<vmem>>, vector<8x128xf32>
    tpu.vector_store %arg8[%c0_81, %c0_82], %336 {strides = array<i32>} : memref<8x128xf32, #tpu.memory_space<vmem>>, vector<8x128xf32>,
    %c0_83 = arith.constant 0 : index
    %c0_84 = arith.constant 0 : index
    %345 = vector.load %arg9[%c0_83, %c0_84] : memref<8x128xf32, #tpu.memory_space<vmem>>, vector<8x128xf32>
    tpu.vector_store %arg9[%c0_83, %c0_84], %337 {strides = array<i32>} : memref<8x128xf32, #tpu.memory_space<vmem>>, vector<8x128xf32>,
    %c0_i32_85 = arith.constant 0 : i32
    %346 = arith.cmpi eq, %arg1, %c0_i32_85 : i32
    %347 = arith.extui %346 : i1 to i32
    %c0_i32_86 = arith.constant 0 : i32
    %348 = arith.cmpi ne, %347, %c0_i32_86 : i32
    scf.if %348 {
      %c0_87 = arith.constant 0 : index
      %c0_88 = arith.constant 0 : index
      %349 = vector.load %arg6[%c0_87, %c0_88] : memref<8x128xf32, #tpu.memory_space<vmem>>, vector<8x128xf32>
      tpu.vector_store %arg6[%c0_87, %c0_88], %336 {strides = array<i32>} : memref<8x128xf32, #tpu.memory_space<vmem>>, vector<8x128xf32>,
      %c0_89 = arith.constant 0 : index
      %c0_90 = arith.constant 0 : index
      %350 = vector.load %arg7[%c0_89, %c0_90] : memref<8x128xf32, #tpu.memory_space<vmem>>, vector<8x128xf32>
      tpu.vector_store %arg7[%c0_89, %c0_90], %337 {strides = array<i32>} : memref<8x128xf32, #tpu.memory_space<vmem>>, vector<8x128xf32>,
    } else {
    }
    return
  }
  func.func @transform_0(%arg0: i32, %arg1: i32) -> (i32, i32) {
    %c0_i32 = arith.constant 0 : i32
    %c0_i32_0 = arith.constant 0 : i32
    return %arg0, %c0_i32 : i32, i32
  }
  func.func @transform_1(%arg0: i32, %arg1: i32) -> (i32, i32, i32) {
    %c0_i32 = arith.constant 0 : i32
    %c0_i32_0 = arith.constant 0 : i32
    return %arg1, %arg0, %c0_i32 : i32, i32, i32
  }
  func.func @transform_2(%arg0: i32, %arg1: i32) -> (i32, i32) {
    %c0_i32 = arith.constant 0 : i32
    %c0_i32_0 = arith.constant 0 : i32
    %c0_i32_1 = arith.constant 0 : i32
    return %c0_i32, %c0_i32_0 : i32, i32
  }
  func.func @transform_3(%arg0: i32, %arg1: i32) -> (i32, i32, i32) {
    %c0_i32 = arith.constant 0 : i32
    %c0_i32_0 = arith.constant 0 : i32
    return %arg1, %arg0, %c0_i32 : i32, i32, i32
  }
  func.func @transform_4(%arg0: i32, %arg1: i32) -> (i32, i32) {
    %c0_i32 = arith.constant 0 : i32
    %c0_i32_0 = arith.constant 0 : i32
    return %arg0, %c0_i32 : i32, i32
  }
  func.func @transform_5(%arg0: i32, %arg1: i32) -> (i32, i32) {
    %c0_i32 = arith.constant 0 : i32
    %c0_i32_0 = arith.constant 0 : i32
    return %arg0, %c0_i32 : i32, i32
  }
}

</mosaic_0001>

<llo_original>
// kernel: neg.1
$region0: #{neg.1}
  #allocation0 [shape = 's32[1]{0}', space=sflag, size = 0x4, scoped, tag = 'scoped memory for neg.1']
  %s0 = inlined_call_operand.vmem [shape: s32[4], index: 0, kind: input, shape index: {}]
  %s1 = inlined_call_operand.vmem [shape: s32[4], index: 1, kind: output, shape index: {}]
  %v2 = vld [vmem:[%s0] sm:$0x1]
  %3 = xla_tuple %v2
  %4 = xla_tuple %3
  %v5 = vsub.s32 0, %v2
  %6 = xla_tuple %v5
  %7 = vst [vmem:[%s1] sm:$0x1] %v5

// kernel: encoder_latent_forward.1
$region0: #{encoder_latent_forward.1}
  #allocation0 [shape = 'u32[]', space=smem, size = 0x4, offset = 0x4, fixed_abs, tag = 'smem constant byte address 0x4 - core index']
  #allocation1 [shape = 'u32[144,128]{1,0:T(1,128)}', space=vmem, size = 0x12000, scoped, tag = 'internal scratch']
  #allocation2 [shape = 'f32[8,128]{1,0:T(8,128)}', space=vmem, size = 0x1000, scoped, tag = 'scratch operand']
  #allocation3 [shape = 'f32[8,128]{1,0:T(8,128)}', space=vmem, size = 0x1000, scoped, tag = 'scratch operand']
  %s0 = inlined_call_operand.vmem [shape: s32[8,128], index: 0, kind: input, shape index: {}]
  %s1 = inlined_call_operand.vmem [shape: f32[8,8,512], index: 1, kind: input, shape index: {}]
  %s2 = inlined_call_operand.vmem [shape: bf16[128,512], index: 2, kind: input, shape index: {}]
  %s3 = inlined_call_operand.vmem [shape: f32[8,8,128], index: 3, kind: output, shape index: {0}]
  %s4 = inlined_call_operand.vmem [shape: f32[8,128], index: 4, kind: output, shape index: {1}]
  %s5 = inlined_call_operand.vmem [shape: f32[8,128], index: 5, kind: output, shape index: {2}]
  %6 = xla_tuple %s3, %s4, %s5
  %s7 = sld [smem:[#allocation0]]
  $region46: #{encoder_latent_forward.1} parent=0
    _
  %s9 = ssub.s32 1, %s7
  %s10 = scalar_select 0, %s9, %s7
  // Predicated region
  $region2: #{encoder_latent_forward.1} parent=0 // pred_check
    _
  $region3: #{encoder_latent_forward.1} parent=0 // pred_check_branch
    %12 = sbr.rel (0) target = $region5
  $region4: #{encoder_latent_forward.1} parent=0 // pred_region
    _
  $region5: #{encoder_latent_forward.1} parent=0 // pred_fallthru
    _
  // Predicated region
  $region6: #{encoder_latent_forward.1} parent=0 // pred_check
    _
  $region7: #{encoder_latent_forward.1} parent=0 // pred_check_branch
    %14 = sbr.rel (0) target = $region9
  $region8: #{encoder_latent_forward.1} parent=0 // pred_region
    _
  $region9: #{encoder_latent_forward.1} parent=0 // pred_fallthru
    _
  // Predicated region
  $region10: #{encoder_latent_forward.1} parent=0 // pred_check
    _
  $region11: #{encoder_latent_forward.1} parent=0 // pred_check_branch
    %16 = sbr.rel (0) target = $region13
  $region12: #{encoder_latent_forward.1} parent=0 // pred_region
    _
  $region13: #{encoder_latent_forward.1} parent=0 // pred_fallthru
    _
  %p18 = scmp.eq.s32.totalorder 0, 0
  // Predicated region
  $region14: #{encoder_latent_forward.1} parent=0 // pred_check
    %p19 = pneg %p18
  $region15: #{encoder_latent_forward.1} parent=0 // pred_check_branch
    %21 = sbr.rel (%p19) target = $region17
  $region16: #{encoder_latent_forward.1} parent=0 // pred_region
    %22 = vst [vmem:[#allocation2] sm:$0xff] 0.0
    %23 = vst [vmem:[#allocation3] sm:$0xff] 0.0
  $region17: #{encoder_latent_forward.1} parent=0 // pred_fallthru
    _
  %v24 = vld [vmem:[%s0] sm:$0xff]
  %v25 = vld [vmem:[%s2] sm:$0xff]
  %v26 = vld [vmem:[%s2 + $0x8] sm:$0xff]
  %v27 = vld [vmem:[%s2 + $0x10] sm:$0xff]
  %v28 = vld [vmem:[%s2 + $0x18] sm:$0xff]
  %v29 = vld [vmem:[%s2 + $0x20] sm:$0xff]
  %v30 = vld [vmem:[%s2 + $0x28] sm:$0xff]
  %v31 = vld [vmem:[%s2 + $0x30] sm:$0xff]
  %v32 = vld [vmem:[%s2 + $0x38] sm:$0xff]
  %v33 = vld [vmem:[%s2 + $0x40] sm:$0xff]
  %v34 = vld [vmem:[%s2 + $0x48] sm:$0xff]
  %v35 = vld [vmem:[%s2 + $0x50] sm:$0xff]
  %v36 = vld [vmem:[%s2 + $0x58] sm:$0xff]
  %v37 = vld [vmem:[%s2 + $0x60] sm:$0xff]
  %v38 = vld [vmem:[%s2 + $0x68] sm:$0xff]
  %v39 = vld [vmem:[%s2 + $0x70] sm:$0xff]
  %v40 = vld [vmem:[%s2 + $0x78] sm:$0xff]
  %v41 = vld [vmem:[%s2 + $0x80] sm:$0xff]
  %v42 = vld [vmem:[%s2 + $0x88] sm:$0xff]
  %v43 = vld [vmem:[%s2 + $0x90] sm:$0xff]
  %v44 = vld [vmem:[%s2 + $0x98] sm:$0xff]
  %v45 = vld [vmem:[%s2 + $0xa0] sm:$0xff]
  %v46 = vld [vmem:[%s2 + $0xa8] sm:$0xff]
  %v47 = vld [vmem:[%s2 + $0xb0] sm:$0xff]
  %v48 = vld [vmem:[%s2 + $0xb8] sm:$0xff]
  %v49 = vld [vmem:[%s2 + $0xc0] sm:$0xff]
  %v50 = vld [vmem:[%s2 + $0xc8] sm:$0xff]
  %v51 = vld [vmem:[%s2 + $0xd0] sm:$0xff]
  %v52 = vld [vmem:[%s2 + $0xd8] sm:$0xff]
  %v53 = vld [vmem:[%s2 + $0xe0] sm:$0xff]
  %v54 = vld [vmem:[%s2 + $0xe8] sm:$0xff]
  %v55 = vld [vmem:[%s2 + $0xf0] sm:$0xff]
  %v56 = vld [vmem:[%s2 + $0xf8] sm:$0xff]
  %s57 = smul.u32 0, 8
  %v58 = vld [vmem:[#allocation2] sm:$0xff]
  %v59 = vld [vmem:[#allocation3] sm:$0xff]
  %v60 = vld [vmem:[%s1] sm:$0xff]
  %v61 = vld [vmem:[%s1 + $0x8] sm:$0xff]
  %v62 = vld [vmem:[%s1 + $0x10] sm:$0xff]
  %v63 = vld [vmem:[%s1 + $0x18] sm:$0xff]
  %v64 = vpack.c.bf16 %v58, %v58
  %v97 = vunpack.c.l.b16 %v25
  %v98 = vunpack.c.h.b16 %v25
  %v99 = vunpack.c.l.b16 %v26
  %v100 = vunpack.c.h.b16 %v26
  %v101 = vunpack.c.l.b16 %v27
  %v102 = vunpack.c.h.b16 %v27
  %v103 = vunpack.c.l.b16 %v28
  %v104 = vunpack.c.h.b16 %v28
  %v105 = vunpack.c.l.b16 %v29
  %v106 = vunpack.c.h.b16 %v29
  %v107 = vunpack.c.l.b16 %v30
  %v108 = vunpack.c.h.b16 %v30
  %v109 = vunpack.c.l.b16 %v31
  %v110 = vunpack.c.h.b16 %v31
  %v111 = vunpack.c.l.b16 %v32
  %v112 = vunpack.c.h.b16 %v32
  %v113 = vunpack.c.l.b16 %v33
  %v114 = vunpack.c.h.b16 %v33
  %v115 = vunpack.c.l.b16 %v34
  %v116 = vunpack.c.h.b16 %v34
  %v117 = vunpack.c.l.b16 %v35
  %v118 = vunpack.c.h.b16 %v35
  %v119 = vunpack.c.l.b16 %v36
  %v120 = vunpack.c.h.b16 %v36
  %v121 = vunpack.c.l.b16 %v37
  %v122 = vunpack.c.h.b16 %v37
  %v123 = vunpack.c.l.b16 %v38
  %v124 = vunpack.c.h.b16 %v38
  %v125 = vunpack.c.l.b16 %v39
  %v126 = vunpack.c.h.b16 %v39
  %v127 = vunpack.c.l.b16 %v40
  %v128 = vunpack.c.h.b16 %v40
  %v129 = vunpack.c.l.b16 %v41
  %v130 = vunpack.c.h.b16 %v41
  %v131 = vunpack.c.l.b16 %v42
  %v132 = vunpack.c.h.b16 %v42
  %v133 = vunpack.c.l.b16 %v43
  %v134 = vunpack.c.h.b16 %v43
  %v135 = vunpack.c.l.b16 %v44
  %v136 = vunpack.c.h.b16 %v44
  %v137 = vunpack.c.l.b16 %v45
  %v138 = vunpack.c.h.b16 %v45
  %v139 = vunpack.c.l.b16 %v46
  %v140 = vunpack.c.h.b16 %v46
  %v141 = vunpack.c.l.b16 %v47
  %v142 = vunpack.c.h.b16 %v47
  %v143 = vunpack.c.l.b16 %v48
  %v144 = vunpack.c.h.b16 %v48
  %v145 = vunpack.c.l.b16 %v49
  %v146 = vunpack.c.h.b16 %v49
  %v147 = vunpack.c.l.b16 %v50
  %v148 = vunpack.c.h.b16 %v50
  %v149 = vunpack.c.l.b16 %v51
  %v150 = vunpack.c.h.b16 %v51
  %v151 = vunpack.c.l.b16 %v52
  %v152 = vunpack.c.h.b16 %v52
  %v153 = vunpack.c.l.b16 %v53
  %v154 = vunpack.c.h.b16 %v53
  %v155 = vunpack.c.l.b16 %v54
  %v156 = vunpack.c.h.b16 %v54
  %v157 = vunpack.c.l.b16 %v55
  %v158 = vunpack.c.h.b16 %v55
  %v159 = vunpack.c.l.b16 %v56
  %v160 = vunpack.c.h.b16 %v56
  %v161 = vpack.c.b16 %v101, %v97
  %v162 = vpack.c.b16 %v102, %v98
  %v163 = vpack.c.b16 %v103, %v99
  %v164 = vpack.c.b16 %v104, %v100
  %v165 = vpack.c.b16 %v109, %v105
  %v166 = vpack.c.b16 %v110, %v106
  %v167 = vpack.c.b16 %v111, %v107
  %v168 = vpack.c.b16 %v112, %v108
  %v169 = vpack.c.b16 %v117, %v113
  %v170 = vpack.c.b16 %v118, %v114
  %v171 = vpack.c.b16 %v119, %v115
  %v172 = vpack.c.b16 %v120, %v116
  %v173 = vpack.c.b16 %v125, %v121
  %v174 = vpack.c.b16 %v126, %v122
  %v175 = vpack.c.b16 %v127, %v123
  %v176 = vpack.c.b16 %v128, %v124
  %v177 = vpack.c.b16 %v133, %v129
  %v178 = vpack.c.b16 %v134, %v130
  %v179 = vpack.c.b16 %v135, %v131
  %v180 = vpack.c.b16 %v136, %v132
  %v181 = vpack.c.b16 %v141, %v137
  %v182 = vpack.c.b16 %v142, %v138
  %v183 = vpack.c.b16 %v143, %v139
  %v184 = vpack.c.b16 %v144, %v140
  %v185 = vpack.c.b16 %v149, %v145
  %v186 = vpack.c.b16 %v150, %v146
  %v187 = vpack.c.b16 %v151, %v147
  %v188 = vpack.c.b16 %v152, %v148
  %v189 = vpack.c.b16 %v157, %v153
  %v190 = vpack.c.b16 %v158, %v154
  %v191 = vpack.c.b16 %v159, %v155
  %v192 = vpack.c.b16 %v160, %v156
  %225 = vmatprep.subr.bf16.mxu0 %v190
  %226 = vmatpush1.bf16.msra.mxu0 %v189
  %227 = vmatprep.subr.bf16.mxu0 %v186
  %228 = vmatpush1.bf16.msra.mxu0 %v185
  %229 = vmatprep.subr.bf16.mxu0 %v182
  %230 = vmatpush1.bf16.msra.mxu0 %v181
  %231 = vmatprep.subr.bf16.mxu0 %v178
  %232 = vmatpush1.bf16.msra.mxu0 %v177
  %233 = vmatprep.subr.bf16.mxu0 %v174
  %234 = vmatpush1.bf16.msra.mxu0 %v173
  %235 = vmatprep.subr.bf16.mxu0 %v170
  %236 = vmatpush1.bf16.msra.mxu0 %v169
  %237 = vmatprep.subr.bf16.mxu0 %v166
  %238 = vmatpush1.bf16.msra.mxu0 %v165
  %239 = vmatprep.subr.bf16.mxu0 %v162
  %240 = vmatpush1.bf16.msra.mxu0 %v161
  %241 = vmatprep.subr.bf16.mxu0 0
  %242 = vmatpush2.bf16.msra.mxu0 0
  %243 = vmatprep.subr.bf16.mxu0 0
  %244 = vmatpush2.bf16.msra.mxu0 0
  %245 = vmatprep.subr.bf16.mxu0 0
  %246 = vmatpush2.bf16.msra.mxu0 0
  %247 = vmatprep.subr.bf16.mxu0 0
  %248 = vmatpush2.bf16.msra.mxu0 0
  %249 = vmatprep.subr.bf16.mxu0 0
  %250 = vmatpush2.bf16.msra.mxu0 0
  %251 = vmatprep.subr.bf16.mxu0 0
  %252 = vmatpush2.bf16.msra.mxu0 0
  %253 = vmatprep.subr.bf16.mxu0 0
  %254 = vmatpush2.bf16.msra.mxu0 0
  %255 = vmatprep.subr.bf16.mxu0 0
  %256 = vmatpush2.bf16.msra.mxu0 0
  %257 = vmatprep.mubr.bf16.mxu0 0
  %258 = vmatmul.mubr.bf16.gmra.mxu0 %v64
  %v259 = vpop.f32.mrf.mxu0
  %v260 = vadd.f32 0.0, %v259
  %v261 = vpop.f32.mrf.mxu0
  %v262 = vadd.f32 0.0, %v261
  %v263 = vpop.f32.mrf.mxu0
  %v264 = vpop.f32.mrf.mxu0
  %265 = vdwg.mxu0
  %266 = vmatprep.subr.bf16.mxu0 %v192
  %267 = vmatpush1.bf16.msra.mxu0 %v191
  %268 = vmatprep.subr.bf16.mxu0 %v188
  %269 = vmatpush1.bf16.msra.mxu0 %v187
  %270 = vmatprep.subr.bf16.mxu0 %v184
  %271 = vmatpush1.bf16.msra.mxu0 %v183
  %272 = vmatprep.subr.bf16.mxu0 %v180
  %273 = vmatpush1.bf16.msra.mxu0 %v179
  %274 = vmatprep.subr.bf16.mxu0 %v176
  %275 = vmatpush1.bf16.msra.mxu0 %v175
  %276 = vmatprep.subr.bf16.mxu0 %v172
  %277 = vmatpush1.bf16.msra.mxu0 %v171
  %278 = vmatprep.subr.bf16.mxu0 %v168
  %279 = vmatpush1.bf16.msra.mxu0 %v167
  %280 = vmatprep.subr.bf16.mxu0 %v164
  %281 = vmatpush1.bf16.msra.mxu0 %v163
  %282 = vmatprep.subr.bf16.mxu0 0
  %283 = vmatpush2.bf16.msra.mxu0 0
  %284 = vmatprep.subr.bf16.mxu0 0
  %285 = vmatpush2.bf16.msra.mxu0 0
  %286 = vmatprep.subr.bf16.mxu0 0
  %287 = vmatpush2.bf16.msra.mxu0 0
  %288 = vmatprep.subr.bf16.mxu0 0
  %289 = vmatpush2.bf16.msra.mxu0 0
  %290 = vmatprep.subr.bf16.mxu0 0
  %291 = vmatpush2.bf16.msra.mxu0 0
  %292 = vmatprep.subr.bf16.mxu0 0
  %293 = vmatpush2.bf16.msra.mxu0 0
  %294 = vmatprep.subr.bf16.mxu0 0
  %295 = vmatpush2.bf16.msra.mxu0 0
  %296 = vmatprep.subr.bf16.mxu0 0
  %297 = vmatpush2.bf16.msra.mxu0 0
  %298 = vmatprep.mubr.bf16.mxu0 0
  %299 = vmatmul.mubr.bf16.gmra.mxu0 %v64
  %v300 = vpop.f32.mrf.mxu0
  %v301 = vadd.f32 0.0, %v300
  %v302 = vpop.f32.mrf.mxu0
  %v303 = vadd.f32 0.0, %v302
  %v304 = vpop.f32.mrf.mxu0
  %v305 = vpop.f32.mrf.mxu0
  %306 = vdwg.mxu0
  %v307 = vadd.f32 %v60, %v260
  %v308 = vadd.f32 %v61, %v262
  %v309 = vadd.f32 %v62, %v301
  %v310 = vadd.f32 %v63, %v303
  %v311 = vxor.u32 %v307, 2147483648
  %v312 = vmul.f32 %v311, 1.442695
  %v313 = vpow.pop %v312
  %v314 = vadd.f32 %v313, 1.0
  %v315 = vrcp.pop %v314
  %v316 = vmul.f32 1.0, %v315
  %v317 = vxor.u32 %v308, 2147483648
  %v318 = vmul.f32 %v317, 1.442695
  %v319 = vpow.pop %v318
  %v320 = vadd.f32 %v319, 1.0
  %v321 = vrcp.pop %v320
  %v322 = vmul.f32 1.0, %v321
  %v323 = vtanh.pop %v309
  %v324 = vxor.u32 %v310, 2147483648
  %v325 = vmul.f32 %v324, 1.442695
  %v326 = vpow.pop %v325
  %v327 = vadd.f32 %v326, 1.0
  %v328 = vrcp.pop %v327
  %v329 = vmul.f32 1.0, %v328
  %v330 = vmul.f32 %v322, %v59
  %v331 = vmul.f32 %v316, %v323
  %v332 = vadd.f32 %v330, %v331
  %v333 = vtanh.pop %v332
  %v334 = vmul.f32 %v329, %v333
  %v335 = vstv %s57
  %vm336 = vcmp.gt.s32.totalorder %v24, %v335
  %v337 = vsel %vm336, %v334, %v58
  %v338 = vsel %vm336, %v332, %v59
  %v339 = vsel %vm336, %v334, 0.0
  %340 = vst [vmem:[%s3] sm:$0xff] %v339
  %s341 = scalar_lea.vmem %s1, 32
  %v342 = vld [vmem:[%s341] sm:$0xff]
  %v343 = vld [vmem:[%s341 + $0x8] sm:$0xff]
  %v344 = vld [vmem:[%s341 + $0x10] sm:$0xff]
  %v345 = vld [vmem:[%s341 + $0x18] sm:$0xff]
  %v346 = vpack.c.bf16 %v337, %v337
  %347 = vmatprep.subr.bf16.mxu0 %v190
  %348 = vmatpush1.bf16.msra.mxu0 %v189
  %349 = vmatprep.subr.bf16.mxu0 %v186
  %350 = vmatpush1.bf16.msra.mxu0 %v185
  %351 = vmatprep.subr.bf16.mxu0 %v182
  %352 = vmatpush1.bf16.msra.mxu0 %v181
  %353 = vmatprep.subr.bf16.mxu0 %v178
  %354 = vmatpush1.bf16.msra.mxu0 %v177
  %355 = vmatprep.subr.bf16.mxu0 %v174
  %356 = vmatpush1.bf16.msra.mxu0 %v173
  %357 = vmatprep.subr.bf16.mxu0 %v170
  %358 = vmatpush1.bf16.msra.mxu0 %v169
  %359 = vmatprep.subr.bf16.mxu0 %v166
  %360 = vmatpush1.bf16.msra.mxu0 %v165
  %361 = vmatprep.subr.bf16.mxu0 %v162
  %362 = vmatpush1.bf16.msra.mxu0 %v161
  %363 = vmatprep.subr.bf16.mxu0 0
  %364 = vmatpush2.bf16.msra.mxu0 0
  %365 = vmatprep.subr.bf16.mxu0 0
  %366 = vmatpush2.bf16.msra.mxu0 0
  %367 = vmatprep.subr.bf16.mxu0 0
  %368 = vmatpush2.bf16.msra.mxu0 0
  %369 = vmatprep.subr.bf16.mxu0 0
  %370 = vmatpush2.bf16.msra.mxu0 0
  %371 = vmatprep.subr.bf16.mxu0 0
  %372 = vmatpush2.bf16.msra.mxu0 0
  %373 = vmatprep.subr.bf16.mxu0 0
  %374 = vmatpush2.bf16.msra.mxu0 0
  %375 = vmatprep.subr.bf16.mxu0 0
  %376 = vmatpush2.bf16.msra.mxu0 0
  %377 = vmatprep.subr.bf16.mxu0 0
  %378 = vmatpush2.bf16.msra.mxu0 0
  %379 = vmatprep.mubr.bf16.mxu0 0
  %380 = vmatmul.mubr.bf16.gmra.mxu0 %v346
  %v381 = vpop.f32.mrf.mxu0
  %v382 = vadd.f32 0.0, %v381
  %v383 = vpop.f32.mrf.mxu0
  %v384 = vadd.f32 0.0, %v383
  %v385 = vpop.f32.mrf.mxu0
  %v386 = vpop.f32.mrf.mxu0
  %387 = vdwg.mxu0
  %388 = vmatprep.subr.bf16.mxu0 %v192
  %389 = vmatpush1.bf16.msra.mxu0 %v191
  %390 = vmatprep.subr.bf16.mxu0 %v188
  %391 = vmatpush1.bf16.msra.mxu0 %v187
  %392 = vmatprep.subr.bf16.mxu0 %v184
  %393 = vmatpush1.bf16.msra.mxu0 %v183
  %394 = vmatprep.subr.bf16.mxu0 %v180
  %395 = vmatpush1.bf16.msra.mxu0 %v179
  %396 = vmatprep.subr.bf16.mxu0 %v176
  %397 = vmatpush1.bf16.msra.mxu0 %v175
  %398 = vmatprep.subr.bf16.mxu0 %v172
  %399 = vmatpush1.bf16.msra.mxu0 %v171
  %400 = vmatprep.subr.bf16.mxu0 %v168
  %401 = vmatpush1.bf16.msra.mxu0 %v167
  %402 = vmatprep.subr.bf16.mxu0 %v164
  %403 = vmatpush1.bf16.msra.mxu0 %v163
  %404 = vmatprep.subr.bf16.mxu0 0
  %405 = vmatpush2.bf16.msra.mxu0 0
  %406 = vmatprep.subr.bf16.mxu0 0
  %407 = vmatpush2.bf16.msra.mxu0 0
  %408 = vmatprep.subr.bf16.mxu0 0
  %409 = vmatpush2.bf16.msra.mxu0 0
  %410 = vmatprep.subr.bf16.mxu0 0
  %411 = vmatpush2.bf16.msra.mxu0 0
  %412 = vmatprep.subr.bf16.mxu0 0
  %413 = vmatpush2.bf16.msra.mxu0 0
  %414 = vmatprep.subr.bf16.mxu0 0
  %415 = vmatpush2.bf16.msra.mxu0 0
  %416 = vmatprep.subr.bf16.mxu0 0
  %417 = vmatpush2.bf16.msra.mxu0 0
  %418 = vmatprep.subr.bf16.mxu0 0
  %419 = vmatpush2.bf16.msra.mxu0 0
  %420 = vmatprep.mubr.bf16.mxu0 0
  %421 = vmatmul.mubr.bf16.gmra.mxu0 %v346
  %v422 = vpop.f32.mrf.mxu0
  %v423 = vadd.f32 0.0, %v422
  %v424 = vpop.f32.mrf.mxu0
  %v425 = vadd.f32 0.0, %v424
  %v426 = vpop.f32.mrf.mxu0
  %v427 = vpop.f32.mrf.mxu0
  %428 = vdwg.mxu0
  %v429 = vadd.f32 %v342, %v382
  %v430 = vadd.f32 %v343, %v384
  %v431 = vadd.f32 %v344, %v423
  %v432 = vadd.f32 %v345, %v425
  %v433 = vxor.u32 %v429, 2147483648
  %v434 = vmul.f32 %v433, 1.442695
  %v435 = vpow.pop %v434
  %v436 = vadd.f32 %v435, 1.0
  %v437 = vrcp.pop %v436
  %v438 = vmul.f32 1.0, %v437
  %v439 = vxor.u32 %v430, 2147483648
  %v440 = vmul.f32 %v439, 1.442695
  %v441 = vpow.pop %v440
  %v442 = vadd.f32 %v441, 1.0
  %v443 = vrcp.pop %v442
  %v444 = vmul.f32 1.0, %v443
  %v445 = vtanh.pop %v431
  %v446 = vxor.u32 %v432, 2147483648
  %v447 = vmul.f32 %v446, 1.442695
  %v448 = vpow.pop %v447
  %v449 = vadd.f32 %v448, 1.0
  %v450 = vrcp.pop %v449
  %v451 = vmul.f32 1.0, %v450
  %v452 = vmul.f32 %v444, %v338
  %v453 = vmul.f32 %v438, %v445
  %v454 = vadd.f32 %v452, %v453
  %v455 = vtanh.pop %v454
  %v456 = vmul.f32 %v451, %v455
  %s457 = sadd.s32 %s57, 1
  %v458 = vstv %s457
  %vm459 = vcmp.gt.s32.totalorder %v24, %v458
  %v460 = vsel %vm459, %v456, %v337
  %v461 = vsel %vm459, %v454, %v338
  %v462 = vsel %vm459, %v456, 0.0
  %s463 = scalar_lea.vmem %s3, 8
  %464 = vst [vmem:[%s463] sm:$0xff] %v462
  %s465 = scalar_lea.vmem %s1, 64
  %v466 = vld [vmem:[%s465] sm:$0xff]
  %v467 = vld [vmem:[%s465 + $0x8] sm:$0xff]
  %v468 = vld [vmem:[%s465 + $0x10] sm:$0xff]
  %v469 = vld [vmem:[%s465 + $0x18] sm:$0xff]
  %v470 = vpack.c.bf16 %v460, %v460
  %471 = vmatprep.subr.bf16.mxu0 %v190
  %472 = vmatpush1.bf16.msra.mxu0 %v189
  %473 = vmatprep.subr.bf16.mxu0 %v186
  %474 = vmatpush1.bf16.msra.mxu0 %v185
  %475 = vmatprep.subr.bf16.mxu0 %v182
  %476 = vmatpush1.bf16.msra.mxu0 %v181
  %477 = vmatprep.subr.bf16.mxu0 %v178
  %478 = vmatpush1.bf16.msra.mxu0 %v177
  %479 = vmatprep.subr.bf16.mxu0 %v174
  %480 = vmatpush1.bf16.msra.mxu0 %v173
  %481 = vmatprep.subr.bf16.mxu0 %v170
  %482 = vmatpush1.bf16.msra.mxu0 %v169
  %483 = vmatprep.subr.bf16.mxu0 %v166
  %484 = vmatpush1.bf16.msra.mxu0 %v165
  %485 = vmatprep.subr.bf16.mxu0 %v162
  %486 = vmatpush1.bf16.msra.mxu0 %v161
  %487 = vmatprep.subr.bf16.mxu0 0
  %488 = vmatpush2.bf16.msra.mxu0 0
  %489 = vmatprep.subr.bf16.mxu0 0
  %490 = vmatpush2.bf16.msra.mxu0 0
  %491 = vmatprep.subr.bf16.mxu0 0
  %492 = vmatpush2.bf16.msra.mxu0 0
  %493 = vmatprep.subr.bf16.mxu0 0
  %494 = vmatpush2.bf16.msra.mxu0 0
  %495 = vmatprep.subr.bf16.mxu0 0
  %496 = vmatpush2.bf16.msra.mxu0 0
  %497 = vmatprep.subr.bf16.mxu0 0
  %498 = vmatpush2.bf16.msra.mxu0 0
  %499 = vmatprep.subr.bf16.mxu0 0
  %500 = vmatpush2.bf16.msra.mxu0 0
  %501 = vmatprep.subr.bf16.mxu0 0
  %502 = vmatpush2.bf16.msra.mxu0 0
  %503 = vmatprep.mubr.bf16.mxu0 0
  %504 = vmatmul.mubr.bf16.gmra.mxu0 %v470
  %v505 = vpop.f32.mrf.mxu0
  %v506 = vadd.f32 0.0, %v505
  %v507 = vpop.f32.mrf.mxu0
  %v508 = vadd.f32 0.0, %v507
  %v509 = vpop.f32.mrf.mxu0
  %v510 = vpop.f32.mrf.mxu0
  %511 = vdwg.mxu0
  %512 = vmatprep.subr.bf16.mxu0 %v192
  %513 = vmatpush1.bf16.msra.mxu0 %v191
  %514 = vmatprep.subr.bf16.mxu0 %v188
  %515 = vmatpush1.bf16.msra.mxu0 %v187
  %516 = vmatprep.subr.bf16.mxu0 %v184
  %517 = vmatpush1.bf16.msra.mxu0 %v183
  %518 = vmatprep.subr.bf16.mxu0 %v180
  %519 = vmatpush1.bf16.msra.mxu0 %v179
  %520 = vmatprep.subr.bf16.mxu0 %v176
  %521 = vmatpush1.bf16.msra.mxu0 %v175
  %522 = vmatprep.subr.bf16.mxu0 %v172
  %523 = vmatpush1.bf16.msra.mxu0 %v171
  %524 = vmatprep.subr.bf16.mxu0 %v168
  %525 = vmatpush1.bf16.msra.mxu0 %v167
  %526 = vmatprep.subr.bf16.mxu0 %v164
  %527 = vmatpush1.bf16.msra.mxu0 %v163
  %528 = vmatprep.subr.bf16.mxu0 0
  %529 = vmatpush2.bf16.msra.mxu0 0
  %530 = vmatprep.subr.bf16.mxu0 0
  %531 = vmatpush2.bf16.msra.mxu0 0
  %532 = vmatprep.subr.bf16.mxu0 0
  %533 = vmatpush2.bf16.msra.mxu0 0
  %534 = vmatprep.subr.bf16.mxu0 0
  %535 = vmatpush2.bf16.msra.mxu0 0
  %536 = vmatprep.subr.bf16.mxu0 0
  %537 = vmatpush2.bf16.msra.mxu0 0
  %538 = vmatprep.subr.bf16.mxu0 0
  %539 = vmatpush2.bf16.msra.mxu0 0
  %540 = vmatprep.subr.bf16.mxu0 0
  %541 = vmatpush2.bf16.msra.mxu0 0
  %542 = vmatprep.subr.bf16.mxu0 0
  %543 = vmatpush2.bf16.msra.mxu0 0
  %544 = vmatprep.mubr.bf16.mxu0 0
  %545 = vmatmul.mubr.bf16.gmra.mxu0 %v470
  %v546 = vpop.f32.mrf.mxu0
  %v547 = vadd.f32 0.0, %v546
  %v548 = vpop.f32.mrf.mxu0
  %v549 = vadd.f32 0.0, %v548
  %v550 = vpop.f32.mrf.mxu0
  %v551 = vpop.f32.mrf.mxu0
  %552 = vdwg.mxu0
  %v553 = vadd.f32 %v466, %v506
  %v554 = vadd.f32 %v467, %v508
  %v555 = vadd.f32 %v468, %v547
  %v556 = vadd.f32 %v469, %v549
  %v557 = vxor.u32 %v553, 2147483648
  %v558 = vmul.f32 %v557, 1.442695
  %v559 = vpow.pop %v558
  %v560 = vadd.f32 %v559, 1.0
  %v561 = vrcp.pop %v560
  %v562 = vmul.f32 1.0, %v561
  %v563 = vxor.u32 %v554, 2147483648
  %v564 = vmul.f32 %v563, 1.442695
  %v565 = vpow.pop %v564
  %v566 = vadd.f32 %v565, 1.0
  %v567 = vrcp.pop %v566
  %v568 = vmul.f32 1.0, %v567
  %v569 = vtanh.pop %v555
  %v570 = vxor.u32 %v556, 2147483648
  %v571 = vmul.f32 %v570, 1.442695
  %v572 = vpow.pop %v571
  %v573 = vadd.f32 %v572, 1.0
  %v574 = vrcp.pop %v573
  %v575 = vmul.f32 1.0, %v574
  %v576 = vmul.f32 %v568, %v461
  %v577 = vmul.f32 %v562, %v569
  %v578 = vadd.f32 %v576, %v577
  %v579 = vtanh.pop %v578
  %v580 = vmul.f32 %v575, %v579
  %s581 = sadd.s32 %s57, 2
  %v582 = vstv %s581
  %vm583 = vcmp.gt.s32.totalorder %v24, %v582
  %v584 = vsel %vm583, %v580, %v460
  %v585 = vsel %vm583, %v578, %v461
  %v586 = vsel %vm583, %v580, 0.0
  %s587 = scalar_lea.vmem %s3, 16
  %588 = vst [vmem:[%s587] sm:$0xff] %v586
  %s589 = scalar_lea.vmem %s1, 96
  %v590 = vld [vmem:[%s589] sm:$0xff]
  %v591 = vld [vmem:[%s589 + $0x8] sm:$0xff]
  %v592 = vld [vmem:[%s589 + $0x10] sm:$0xff]
  %v593 = vld [vmem:[%s589 + $0x18] sm:$0xff]
  %v594 = vpack.c.bf16 %v584, %v584
  %595 = vmatprep.subr.bf16.mxu0 %v190
  %596 = vmatpush1.bf16.msra.mxu0 %v189
  %597 = vmatprep.subr.bf16.mxu0 %v186
  %598 = vmatpush1.bf16.msra.mxu0 %v185
  %599 = vmatprep.subr.bf16.mxu0 %v182
  %600 = vmatpush1.bf16.msra.mxu0 %v181
  %601 = vmatprep.subr.bf16.mxu0 %v178
  %602 = vmatpush1.bf16.msra.mxu0 %v177
  %603 = vmatprep.subr.bf16.mxu0 %v174
  %604 = vmatpush1.bf16.msra.mxu0 %v173
  %605 = vmatprep.subr.bf16.mxu0 %v170
  %606 = vmatpush1.bf16.msra.mxu0 %v169
  %607 = vmatprep.subr.bf16.mxu0 %v166
  %608 = vmatpush1.bf16.msra.mxu0 %v165
  %609 = vmatprep.subr.bf16.mxu0 %v162
  %610 = vmatpush1.bf16.msra.mxu0 %v161
  %611 = vmatprep.subr.bf16.mxu0 0
  %612 = vmatpush2.bf16.msra.mxu0 0
  %613 = vmatprep.subr.bf16.mxu0 0
  %614 = vmatpush2.bf16.msra.mxu0 0
  %615 = vmatprep.subr.bf16.mxu0 0
  %616 = vmatpush2.bf16.msra.mxu0 0
  %617 = vmatprep.subr.bf16.mxu0 0
  %618 = vmatpush2.bf16.msra.mxu0 0
  %619 = vmatprep.subr.bf16.mxu0 0
  %620 = vmatpush2.bf16.msra.mxu0 0
  %621 = vmatprep.subr.bf16.mxu0 0
  %622 = vmatpush2.bf16.msra.mxu0 0
  %623 = vmatprep.subr.bf16.mxu0 0
  %624 = vmatpush2.bf16.msra.mxu0 0
  %625 = vmatprep.subr.bf16.mxu0 0
  %626 = vmatpush2.bf16.msra.mxu0 0
  %627 = vmatprep.mubr.bf16.mxu0 0
  %628 = vmatmul.mubr.bf16.gmra.mxu0 %v594
  %v629 = vpop.f32.mrf.mxu0
  %v630 = vadd.f32 0.0, %v629
  %v631 = vpop.f32.mrf.mxu0
  %v632 = vadd.f32 0.0, %v631
  %v633 = vpop.f32.mrf.mxu0
  %v634 = vpop.f32.mrf.mxu0
  %635 = vdwg.mxu0
  %636 = vmatprep.subr.bf16.mxu0 %v192
  %637 = vmatpush1.bf16.msra.mxu0 %v191
  %638 = vmatprep.subr.bf16.mxu0 %v188
  %639 = vmatpush1.bf16.msra.mxu0 %v187
  %640 = vmatprep.subr.bf16.mxu0 %v184
  %641 = vmatpush1.bf16.msra.mxu0 %v183
  %642 = vmatprep.subr.bf16.mxu0 %v180
  %643 = vmatpush1.bf16.msra.mxu0 %v179
  %644 = vmatprep.subr.bf16.mxu0 %v176
  %645 = vmatpush1.bf16.msra.mxu0 %v175
  %646 = vmatprep.subr.bf16.mxu0 %v172
  %647 = vmatpush1.bf16.msra.mxu0 %v171
  %648 = vmatprep.subr.bf16.mxu0 %v168
  %649 = vmatpush1.bf16.msra.mxu0 %v167
  %650 = vmatprep.subr.bf16.mxu0 %v164
  %651 = vmatpush1.bf16.msra.mxu0 %v163
  %652 = vmatprep.subr.bf16.mxu0 0
  %653 = vmatpush2.bf16.msra.mxu0 0
  %654 = vmatprep.subr.bf16.mxu0 0
  %655 = vmatpush2.bf16.msra.mxu0 0
  %656 = vmatprep.subr.bf16.mxu0 0
  %657 = vmatpush2.bf16.msra.mxu0 0
  %658 = vmatprep.subr.bf16.mxu0 0
  %659 = vmatpush2.bf16.msra.mxu0 0
  %660 = vmatprep.subr.bf16.mxu0 0
  %661 = vmatpush2.bf16.msra.mxu0 0
  %662 = vmatprep.subr.bf16.mxu0 0
  %663 = vmatpush2.bf16.msra.mxu0 0
  %664 = vmatprep.subr.bf16.mxu0 0
  %665 = vmatpush2.bf16.msra.mxu0 0
  %666 = vmatprep.subr.bf16.mxu0 0
  %667 = vmatpush2.bf16.msra.mxu0 0
  %668 = vmatprep.mubr.bf16.mxu0 0
  %669 = vmatmul.mubr.bf16.gmra.mxu0 %v594
  %v670 = vpop.f32.mrf.mxu0
  %v671 = vadd.f32 0.0, %v670
  %v672 = vpop.f32.mrf.mxu0
  %v673 = vadd.f32 0.0, %v672
  %v674 = vpop.f32.mrf.mxu0
  %v675 = vpop.f32.mrf.mxu0
  %676 = vdwg.mxu0
  %v677 = vadd.f32 %v590, %v630
  %v678 = vadd.f32 %v591, %v632
  %v679 = vadd.f32 %v592, %v671
  %v680 = vadd.f32 %v593, %v673
  %v681 = vxor.u32 %v677, 2147483648
  %v682 = vmul.f32 %v681, 1.442695
  %v683 = vpow.pop %v682
  %v684 = vadd.f32 %v683, 1.0
  %v685 = vrcp.pop %v684
  %v686 = vmul.f32 1.0, %v685
  %v687 = vxor.u32 %v678, 2147483648
  %v688 = vmul.f32 %v687, 1.442695
  %v689 = vpow.pop %v688
  %v690 = vadd.f32 %v689, 1.0
  %v691 = vrcp.pop %v690
  %v692 = vmul.f32 1.0, %v691
  %v693 = vtanh.pop %v679
  %v694 = vxor.u32 %v680, 2147483648
  %v695 = vmul.f32 %v694, 1.442695
  %v696 = vpow.pop %v695
  %v697 = vadd.f32 %v696, 1.0
  %v698 = vrcp.pop %v697
  %v699 = vmul.f32 1.0, %v698
  %v700 = vmul.f32 %v692, %v585
  %v701 = vmul.f32 %v686, %v693
  %v702 = vadd.f32 %v700, %v701
  %v703 = vtanh.pop %v702
  %v704 = vmul.f32 %v699, %v703
  %s705 = sadd.s32 %s57, 3
  %v706 = vstv %s705
  %vm707 = vcmp.gt.s32.totalorder %v24, %v706
  %v708 = vsel %vm707, %v704, %v584
  %v709 = vsel %vm707, %v702, %v585
  %v710 = vsel %vm707, %v704, 0.0
  %s711 = scalar_lea.vmem %s3, 24
  %712 = vst [vmem:[%s711] sm:$0xff] %v710
  %s713 = scalar_lea.vmem %s1, 128
  %v714 = vld [vmem:[%s713] sm:$0xff]
  %v715 = vld [vmem:[%s713 + $0x8] sm:$0xff]
  %v716 = vld [vmem:[%s713 + $0x10] sm:$0xff]
  %v717 = vld [vmem:[%s713 + $0x18] sm:$0xff]
  %v718 = vpack.c.bf16 %v708, %v708
  %719 = vmatprep.subr.bf16.mxu0 %v190
  %720 = vmatpush1.bf16.msra.mxu0 %v189
  %721 = vmatprep.subr.bf16.mxu0 %v186
  %722 = vmatpush1.bf16.msra.mxu0 %v185
  %723 = vmatprep.subr.bf16.mxu0 %v182
  %724 = vmatpush1.bf16.msra.mxu0 %v181
  %725 = vmatprep.subr.bf16.mxu0 %v178
  %726 = vmatpush1.bf16.msra.mxu0 %v177
  %727 = vmatprep.subr.bf16.mxu0 %v174
  %728 = vmatpush1.bf16.msra.mxu0 %v173
  %729 = vmatprep.subr.bf16.mxu0 %v170
  %730 = vmatpush1.bf16.msra.mxu0 %v169
  %731 = vmatprep.subr.bf16.mxu0 %v166
  %732 = vmatpush1.bf16.msra.mxu0 %v165
  %733 = vmatprep.subr.bf16.mxu0 %v162
  %734 = vmatpush1.bf16.msra.mxu0 %v161
  %735 = vmatprep.subr.bf16.mxu0 0
  %736 = vmatpush2.bf16.msra.mxu0 0
  %737 = vmatprep.subr.bf16.mxu0 0
  %738 = vmatpush2.bf16.msra.mxu0 0
  %739 = vmatprep.subr.bf16.mxu0 0
  %740 = vmatpush2.bf16.msra.mxu0 0
  %741 = vmatprep.subr.bf16.mxu0 0
  %742 = vmatpush2.bf16.msra.mxu0 0
  %743 = vmatprep.subr.bf16.mxu0 0
  %744 = vmatpush2.bf16.msra.mxu0 0
  %745 = vmatprep.subr.bf16.mxu0 0
  %746 = vmatpush2.bf16.msra.mxu0 0
  %747 = vmatprep.subr.bf16.mxu0 0
  %748 = vmatpush2.bf16.msra.mxu0 0
  %749 = vmatprep.subr.bf16.mxu0 0
  %750 = vmatpush2.bf16.msra.mxu0 0
  %751 = vmatprep.mubr.bf16.mxu0 0
  %752 = vmatmul.mubr.bf16.gmra.mxu0 %v718
  %v753 = vpop.f32.mrf.mxu0
  %v754 = vadd.f32 0.0, %v753
  %v755 = vpop.f32.mrf.mxu0
  %v756 = vadd.f32 0.0, %v755
  %v757 = vpop.f32.mrf.mxu0
  %v758 = vpop.f32.mrf.mxu0
  %759 = vdwg.mxu0
  %760 = vmatprep.subr.bf16.mxu0 %v192
  %761 = vmatpush1.bf16.msra.mxu0 %v191
  %762 = vmatprep.subr.bf16.mxu0 %v188
  %763 = vmatpush1.bf16.msra.mxu0 %v187
  %764 = vmatprep.subr.bf16.mxu0 %v184
  %765 = vmatpush1.bf16.msra.mxu0 %v183
  %766 = vmatprep.subr.bf16.mxu0 %v180
  %767 = vmatpush1.bf16.msra.mxu0 %v179
  %768 = vmatprep.subr.bf16.mxu0 %v176
  %769 = vmatpush1.bf16.msra.mxu0 %v175
  %770 = vmatprep.subr.bf16.mxu0 %v172
  %771 = vmatpush1.bf16.msra.mxu0 %v171
  %772 = vmatprep.subr.bf16.mxu0 %v168
  %773 = vmatpush1.bf16.msra.mxu0 %v167
  %774 = vmatprep.subr.bf16.mxu0 %v164
  %775 = vmatpush1.bf16.msra.mxu0 %v163
  %776 = vmatprep.subr.bf16.mxu0 0
  %777 = vmatpush2.bf16.msra.mxu0 0
  %778 = vmatprep.subr.bf16.mxu0 0
  %779 = vmatpush2.bf16.msra.mxu0 0
  %780 = vmatprep.subr.bf16.mxu0 0
  %781 = vmatpush2.bf16.msra.mxu0 0
  %782 = vmatprep.subr.bf16.mxu0 0
  %783 = vmatpush2.bf16.msra.mxu0 0
  %784 = vmatprep.subr.bf16.mxu0 0
  %785 = vmatpush2.bf16.msra.mxu0 0
  %786 = vmatprep.subr.bf16.mxu0 0
  %787 = vmatpush2.bf16.msra.mxu0 0
  %788 = vmatprep.subr.bf16.mxu0 0
  %789 = vmatpush2.bf16.msra.mxu0 0
  %790 = vmatprep.subr.bf16.mxu0 0
  %791 = vmatpush2.bf16.msra.mxu0 0
  %792 = vmatprep.mubr.bf16.mxu0 0
  %793 = vmatmul.mubr.bf16.gmra.mxu0 %v718
  %v794 = vpop.f32.mrf.mxu0
  %v795 = vadd.f32 0.0, %v794
  %v796 = vpop.f32.mrf.mxu0
  %v797 = vadd.f32 0.0, %v796
  %v798 = vpop.f32.mrf.mxu0
  %v799 = vpop.f32.mrf.mxu0
  %800 = vdwg.mxu0
  %v801 = vadd.f32 %v714, %v754
  %v802 = vadd.f32 %v715, %v756
  %v803 = vadd.f32 %v716, %v795
  %v804 = vadd.f32 %v717, %v797
  %v805 = vxor.u32 %v801, 2147483648
  %v806 = vmul.f32 %v805, 1.442695
  %v807 = vpow.pop %v806
  %v808 = vadd.f32 %v807, 1.0
  %v809 = vrcp.pop %v808
  %v810 = vmul.f32 1.0, %v809
  %v811 = vxor.u32 %v802, 2147483648
  %v812 = vmul.f32 %v811, 1.442695
  %v813 = vpow.pop %v812
  %v814 = vadd.f32 %v813, 1.0
  %v815 = vrcp.pop %v814
  %v816 = vmul.f32 1.0, %v815
  %v817 = vtanh.pop %v803
  %v818 = vxor.u32 %v804, 2147483648
  %v819 = vmul.f32 %v818, 1.442695
  %v820 = vpow.pop %v819
  %v821 = vadd.f32 %v820, 1.0
  %v822 = vrcp.pop %v821
  %v823 = vmul.f32 1.0, %v822
  %v824 = vmul.f32 %v816, %v709
  %v825 = vmul.f32 %v810, %v817
  %v826 = vadd.f32 %v824, %v825
  %v827 = vtanh.pop %v826
  %v828 = vmul.f32 %v823, %v827
  %s829 = sadd.s32 %s57, 4
  %v830 = vstv %s829
  %vm831 = vcmp.gt.s32.totalorder %v24, %v830
  %v832 = vsel %vm831, %v828, %v708
  %v833 = vsel %vm831, %v826, %v709
  %v834 = vsel %vm831, %v828, 0.0
  %s835 = scalar_lea.vmem %s3, 32
  %836 = vst [vmem:[%s835] sm:$0xff] %v834
  %s837 = scalar_lea.vmem %s1, 160
  %v838 = vld [vmem:[%s837] sm:$0xff]
  %v839 = vld [vmem:[%s837 + $0x8] sm:$0xff]
  %v840 = vld [vmem:[%s837 + $0x10] sm:$0xff]
  %v841 = vld [vmem:[%s837 + $0x18] sm:$0xff]
  %v842 = vpack.c.bf16 %v832, %v832
  %843 = vmatprep.subr.bf16.mxu0 %v190
  %844 = vmatpush1.bf16.msra.mxu0 %v189
  %845 = vmatprep.subr.bf16.mxu0 %v186
  %846 = vmatpush1.bf16.msra.mxu0 %v185
  %847 = vmatprep.subr.bf16.mxu0 %v182
  %848 = vmatpush1.bf16.msra.mxu0 %v181
  %849 = vmatprep.subr.bf16.mxu0 %v178
  %850 = vmatpush1.bf16.msra.mxu0 %v177
  %851 = vmatprep.subr.bf16.mxu0 %v174
  %852 = vmatpush1.bf16.msra.mxu0 %v173
  %853 = vmatprep.subr.bf16.mxu0 %v170
  %854 = vmatpush1.bf16.msra.mxu0 %v169
  %855 = vmatprep.subr.bf16.mxu0 %v166
  %856 = vmatpush1.bf16.msra.mxu0 %v165
  %857 = vmatprep.subr.bf16.mxu0 %v162
  %858 = vmatpush1.bf16.msra.mxu0 %v161
  %859 = vmatprep.subr.bf16.mxu0 0
  %860 = vmatpush2.bf16.msra.mxu0 0
  %861 = vmatprep.subr.bf16.mxu0 0
  %862 = vmatpush2.bf16.msra.mxu0 0
  %863 = vmatprep.subr.bf16.mxu0 0
  %864 = vmatpush2.bf16.msra.mxu0 0
  %865 = vmatprep.subr.bf16.mxu0 0
  %866 = vmatpush2.bf16.msra.mxu0 0
  %867 = vmatprep.subr.bf16.mxu0 0
  %868 = vmatpush2.bf16.msra.mxu0 0
  %869 = vmatprep.subr.bf16.mxu0 0
  %870 = vmatpush2.bf16.msra.mxu0 0
  %871 = vmatprep.subr.bf16.mxu0 0
  %872 = vmatpush2.bf16.msra.mxu0 0
  %873 = vmatprep.subr.bf16.mxu0 0
  %874 = vmatpush2.bf16.msra.mxu0 0
  %875 = vmatprep.mubr.bf16.mxu0 0
  %876 = vmatmul.mubr.bf16.gmra.mxu0 %v842
  %v877 = vpop.f32.mrf.mxu0
  %v878 = vadd.f32 0.0, %v877
  %v879 = vpop.f32.mrf.mxu0
  %v880 = vadd.f32 0.0, %v879
  %v881 = vpop.f32.mrf.mxu0
  %v882 = vpop.f32.mrf.mxu0
  %883 = vdwg.mxu0
  %884 = vmatprep.subr.bf16.mxu0 %v192
  %885 = vmatpush1.bf16.msra.mxu0 %v191
  %886 = vmatprep.subr.bf16.mxu0 %v188
  %887 = vmatpush1.bf16.msra.mxu0 %v187
  %888 = vmatprep.subr.bf16.mxu0 %v184
  %889 = vmatpush1.bf16.msra.mxu0 %v183
  %890 = vmatprep.subr.bf16.mxu0 %v180
  %891 = vmatpush1.bf16.msra.mxu0 %v179
  %892 = vmatprep.subr.bf16.mxu0 %v176
  %893 = vmatpush1.bf16.msra.mxu0 %v175
  %894 = vmatprep.subr.bf16.mxu0 %v172
  %895 = vmatpush1.bf16.msra.mxu0 %v171
  %896 = vmatprep.subr.bf16.mxu0 %v168
  %897 = vmatpush1.bf16.msra.mxu0 %v167
  %898 = vmatprep.subr.bf16.mxu0 %v164
  %899 = vmatpush1.bf16.msra.mxu0 %v163
  %900 = vmatprep.subr.bf16.mxu0 0
  %901 = vmatpush2.bf16.msra.mxu0 0
  %902 = vmatprep.subr.bf16.mxu0 0
  %903 = vmatpush2.bf16.msra.mxu0 0
  %904 = vmatprep.subr.bf16.mxu0 0
  %905 = vmatpush2.bf16.msra.mxu0 0
  %906 = vmatprep.subr.bf16.mxu0 0
  %907 = vmatpush2.bf16.msra.mxu0 0
  %908 = vmatprep.subr.bf16.mxu0 0
  %909 = vmatpush2.bf16.msra.mxu0 0
  %910 = vmatprep.subr.bf16.mxu0 0
  %911 = vmatpush2.bf16.msra.mxu0 0
  %912 = vmatprep.subr.bf16.mxu0 0
  %913 = vmatpush2.bf16.msra.mxu0 0
  %914 = vmatprep.subr.bf16.mxu0 0
  %915 = vmatpush2.bf16.msra.mxu0 0
  %916 = vmatprep.mubr.bf16.mxu0 0
  %917 = vmatmul.mubr.bf16.gmra.mxu0 %v842
  %v918 = vpop.f32.mrf.mxu0
  %v919 = vadd.f32 0.0, %v918
  %v920 = vpop.f32.mrf.mxu0
  %v921 = vadd.f32 0.0, %v920
  %v922 = vpop.f32.mrf.mxu0
  %v923 = vpop.f32.mrf.mxu0
  %924 = vdwg.mxu0
  %v925 = vadd.f32 %v838, %v878
  %v926 = vadd.f32 %v839, %v880
  %v927 = vadd.f32 %v840, %v919
  %v928 = vadd.f32 %v841, %v921
  %v929 = vxor.u32 %v925, 2147483648
  %v930 = vmul.f32 %v929, 1.442695
  %v931 = vpow.pop %v930
  %v932 = vadd.f32 %v931, 1.0
  %v933 = vrcp.pop %v932
  %v934 = vmul.f32 1.0, %v933
  %v935 = vxor.u32 %v926, 2147483648
  %v936 = vmul.f32 %v935, 1.442695
  %v937 = vpow.pop %v936
  %v938 = vadd.f32 %v937, 1.0
  %v939 = vrcp.pop %v938
  %v940 = vmul.f32 1.0, %v939
  %v941 = vtanh.pop %v927
  %v942 = vxor.u32 %v928, 2147483648
  %v943 = vmul.f32 %v942, 1.442695
  %v944 = vpow.pop %v943
  %v945 = vadd.f32 %v944, 1.0
  %v946 = vrcp.pop %v945
  %v947 = vmul.f32 1.0, %v946
  %v948 = vmul.f32 %v940, %v833
  %v949 = vmul.f32 %v934, %v941
  %v950 = vadd.f32 %v948, %v949
  %v951 = vtanh.pop %v950
  %v952 = vmul.f32 %v947, %v951
  %s953 = sadd.s32 %s57, 5
  %v954 = vstv %s953
  %vm955 = vcmp.gt.s32.totalorder %v24, %v954
  %v956 = vsel %vm955, %v952, %v832
  %v957 = vsel %vm955, %v950, %v833
  %v958 = vsel %vm955, %v952, 0.0
  %s959 = scalar_lea.vmem %s3, 40
  %960 = vst [vmem:[%s959] sm:$0xff] %v958
  %s961 = scalar_lea.vmem %s1, 192
  %v962 = vld [vmem:[%s961] sm:$0xff]
  %v963 = vld [vmem:[%s961 + $0x8] sm:$0xff]
  %v964 = vld [vmem:[%s961 + $0x10] sm:$0xff]
  %v965 = vld [vmem:[%s961 + $0x18] sm:$0xff]
  %v966 = vpack.c.bf16 %v956, %v956
  %967 = vmatprep.subr.bf16.mxu0 %v190
  %968 = vmatpush1.bf16.msra.mxu0 %v189
  %969 = vmatprep.subr.bf16.mxu0 %v186
  %970 = vmatpush1.bf16.msra.mxu0 %v185
  %971 = vmatprep.subr.bf16.mxu0 %v182
  %972 = vmatpush1.bf16.msra.mxu0 %v181
  %973 = vmatprep.subr.bf16.mxu0 %v178
  %974 = vmatpush1.bf16.msra.mxu0 %v177
  %975 = vmatprep.subr.bf16.mxu0 %v174
  %976 = vmatpush1.bf16.msra.mxu0 %v173
  %977 = vmatprep.subr.bf16.mxu0 %v170
  %978 = vmatpush1.bf16.msra.mxu0 %v169
  %979 = vmatprep.subr.bf16.mxu0 %v166
  %980 = vmatpush1.bf16.msra.mxu0 %v165
  %981 = vmatprep.subr.bf16.mxu0 %v162
  %982 = vmatpush1.bf16.msra.mxu0 %v161
  %983 = vmatprep.subr.bf16.mxu0 0
  %984 = vmatpush2.bf16.msra.mxu0 0
  %985 = vmatprep.subr.bf16.mxu0 0
  %986 = vmatpush2.bf16.msra.mxu0 0
  %987 = vmatprep.subr.bf16.mxu0 0
  %988 = vmatpush2.bf16.msra.mxu0 0
  %989 = vmatprep.subr.bf16.mxu0 0
  %990 = vmatpush2.bf16.msra.mxu0 0
  %991 = vmatprep.subr.bf16.mxu0 0
  %992 = vmatpush2.bf16.msra.mxu0 0
  %993 = vmatprep.subr.bf16.mxu0 0
  %994 = vmatpush2.bf16.msra.mxu0 0
  %995 = vmatprep.subr.bf16.mxu0 0
  %996 = vmatpush2.bf16.msra.mxu0 0
  %997 = vmatprep.subr.bf16.mxu0 0
  %998 = vmatpush2.bf16.msra.mxu0 0
  %999 = vmatprep.mubr.bf16.mxu0 0
  %1000 = vmatmul.mubr.bf16.gmra.mxu0 %v966
  %v1001 = vpop.f32.mrf.mxu0
  %v1002 = vadd.f32 0.0, %v1001
  %v1003 = vpop.f32.mrf.mxu0
  %v1004 = vadd.f32 0.0, %v1003
  %v1005 = vpop.f32.mrf.mxu0
  %v1006 = vpop.f32.mrf.mxu0
  %1007 = vdwg.mxu0
  %1008 = vmatprep.subr.bf16.mxu0 %v192
  %1009 = vmatpush1.bf16.msra.mxu0 %v191
  %1010 = vmatprep.subr.bf16.mxu0 %v188
  %1011 = vmatpush1.bf16.msra.mxu0 %v187
  %1012 = vmatprep.subr.bf16.mxu0 %v184
  %1013 = vmatpush1.bf16.msra.mxu0 %v183
  %1014 = vmatprep.subr.bf16.mxu0 %v180
  %1015 = vmatpush1.bf16.msra.mxu0 %v179
  %1016 = vmatprep.subr.bf16.mxu0 %v176
  %1017 = vmatpush1.bf16.msra.mxu0 %v175
  %1018 = vmatprep.subr.bf16.mxu0 %v172
  %1019 = vmatpush1.bf16.msra.mxu0 %v171
  %1020 = vmatprep.subr.bf16.mxu0 %v168
  %1021 = vmatpush1.bf16.msra.mxu0 %v167
  %1022 = vmatprep.subr.bf16.mxu0 %v164
  %1023 = vmatpush1.bf16.msra.mxu0 %v163
  %1024 = vmatprep.subr.bf16.mxu0 0
  %1025 = vmatpush2.bf16.msra.mxu0 0
  %1026 = vmatprep.subr.bf16.mxu0 0
  %1027 = vmatpush2.bf16.msra.mxu0 0
  %1028 = vmatprep.subr.bf16.mxu0 0
  %1029 = vmatpush2.bf16.msra.mxu0 0
  %1030 = vmatprep.subr.bf16.mxu0 0
  %1031 = vmatpush2.bf16.msra.mxu0 0
  %1032 = vmatprep.subr.bf16.mxu0 0
  %1033 = vmatpush2.bf16.msra.mxu0 0
  %1034 = vmatprep.subr.bf16.mxu0 0
  %1035 = vmatpush2.bf16.msra.mxu0 0
  %1036 = vmatprep.subr.bf16.mxu0 0
  %1037 = vmatpush2.bf16.msra.mxu0 0
  %1038 = vmatprep.subr.bf16.mxu0 0
  %1039 = vmatpush2.bf16.msra.mxu0 0
  %1040 = vmatprep.mubr.bf16.mxu0 0
  %1041 = vmatmul.mubr.bf16.gmra.mxu0 %v966
  %v1042 = vpop.f32.mrf.mxu0
  %v1043 = vadd.f32 0.0, %v1042
  %v1044 = vpop.f32.mrf.mxu0
  %v1045 = vadd.f32 0.0, %v1044
  %v1046 = vpop.f32.mrf.mxu0
  %v1047 = vpop.f32.mrf.mxu0
  %1048 = vdwg.mxu0
  %v1049 = vadd.f32 %v962, %v1002
  %v1050 = vadd.f32 %v963, %v1004
  %v1051 = vadd.f32 %v964, %v1043
  %v1052 = vadd.f32 %v965, %v1045
  %v1053 = vxor.u32 %v1049, 2147483648
  %v1054 = vmul.f32 %v1053, 1.442695
  %v1055 = vpow.pop %v1054
  %v1056 = vadd.f32 %v1055, 1.0
  %v1057 = vrcp.pop %v1056
  %v1058 = vmul.f32 1.0, %v1057
  %v1059 = vxor.u32 %v1050, 2147483648
  %v1060 = vmul.f32 %v1059, 1.442695
  %v1061 = vpow.pop %v1060
  %v1062 = vadd.f32 %v1061, 1.0
  %v1063 = vrcp.pop %v1062
  %v1064 = vmul.f32 1.0, %v1063
  %v1065 = vtanh.pop %v1051
  %v1066 = vxor.u32 %v1052, 2147483648
  %v1067 = vmul.f32 %v1066, 1.442695
  %v1068 = vpow.pop %v1067
  %v1069 = vadd.f32 %v1068, 1.0
  %v1070 = vrcp.pop %v1069
  %v1071 = vmul.f32 1.0, %v1070
  %v1072 = vmul.f32 %v1064, %v957
  %v1073 = vmul.f32 %v1058, %v1065
  %v1074 = vadd.f32 %v1072, %v1073
  %v1075 = vtanh.pop %v1074
  %v1076 = vmul.f32 %v1071, %v1075
  %s1077 = sadd.s32 %s57, 6
  %v1078 = vstv %s1077
  %vm1079 = vcmp.gt.s32.totalorder %v24, %v1078
  %v1080 = vsel %vm1079, %v1076, %v956
  %v1081 = vsel %vm1079, %v1074, %v957
  %v1082 = vsel %vm1079, %v1076, 0.0
  %s1083 = scalar_lea.vmem %s3, 48
  %1084 = vst [vmem:[%s1083] sm:$0xff] %v1082
  %s1085 = scalar_lea.vmem %s1, 224
  %v1086 = vld [vmem:[%s1085] sm:$0xff]
  %v1087 = vld [vmem:[%s1085 + $0x8] sm:$0xff]
  %v1088 = vld [vmem:[%s1085 + $0x10] sm:$0xff]
  %v1089 = vld [vmem:[%s1085 + $0x18] sm:$0xff]
  %v1090 = vpack.c.bf16 %v1080, %v1080
  %1091 = vmatprep.subr.bf16.mxu0 %v190
  %1092 = vmatpush1.bf16.msra.mxu0 %v189
  %1093 = vmatprep.subr.bf16.mxu0 %v186
  %1094 = vmatpush1.bf16.msra.mxu0 %v185
  %1095 = vmatprep.subr.bf16.mxu0 %v182
  %1096 = vmatpush1.bf16.msra.mxu0 %v181
  %1097 = vmatprep.subr.bf16.mxu0 %v178
  %1098 = vmatpush1.bf16.msra.mxu0 %v177
  %1099 = vmatprep.subr.bf16.mxu0 %v174
  %1100 = vmatpush1.bf16.msra.mxu0 %v173
  %1101 = vmatprep.subr.bf16.mxu0 %v170
  %1102 = vmatpush1.bf16.msra.mxu0 %v169
  %1103 = vmatprep.subr.bf16.mxu0 %v166
  %1104 = vmatpush1.bf16.msra.mxu0 %v165
  %1105 = vmatprep.subr.bf16.mxu0 %v162
  %1106 = vmatpush1.bf16.msra.mxu0 %v161
  %1107 = vmatprep.subr.bf16.mxu0 0
  %1108 = vmatpush2.bf16.msra.mxu0 0
  %1109 = vmatprep.subr.bf16.mxu0 0
  %1110 = vmatpush2.bf16.msra.mxu0 0
  %1111 = vmatprep.subr.bf16.mxu0 0
  %1112 = vmatpush2.bf16.msra.mxu0 0
  %1113 = vmatprep.subr.bf16.mxu0 0
  %1114 = vmatpush2.bf16.msra.mxu0 0
  %1115 = vmatprep.subr.bf16.mxu0 0
  %1116 = vmatpush2.bf16.msra.mxu0 0
  %1117 = vmatprep.subr.bf16.mxu0 0
  %1118 = vmatpush2.bf16.msra.mxu0 0
  %1119 = vmatprep.subr.bf16.mxu0 0
  %1120 = vmatpush2.bf16.msra.mxu0 0
  %1121 = vmatprep.subr.bf16.mxu0 0
  %1122 = vmatpush2.bf16.msra.mxu0 0
  %1123 = vmatprep.mubr.bf16.mxu0 0
  %1124 = vmatmul.mubr.bf16.gmra.mxu0 %v1090
  %v1125 = vpop.f32.mrf.mxu0
  %v1126 = vadd.f32 0.0, %v1125
  %v1127 = vpop.f32.mrf.mxu0
  %v1128 = vadd.f32 0.0, %v1127
  %v1129 = vpop.f32.mrf.mxu0
  %v1130 = vpop.f32.mrf.mxu0
  %1131 = vdwg.mxu0
  %1132 = vmatprep.subr.bf16.mxu0 %v192
  %1133 = vmatpush1.bf16.msra.mxu0 %v191
  %1134 = vmatprep.subr.bf16.mxu0 %v188
  %1135 = vmatpush1.bf16.msra.mxu0 %v187
  %1136 = vmatprep.subr.bf16.mxu0 %v184
  %1137 = vmatpush1.bf16.msra.mxu0 %v183
  %1138 = vmatprep.subr.bf16.mxu0 %v180
  %1139 = vmatpush1.bf16.msra.mxu0 %v179
  %1140 = vmatprep.subr.bf16.mxu0 %v176
  %1141 = vmatpush1.bf16.msra.mxu0 %v175
  %1142 = vmatprep.subr.bf16.mxu0 %v172
  %1143 = vmatpush1.bf16.msra.mxu0 %v171
  %1144 = vmatprep.subr.bf16.mxu0 %v168
  %1145 = vmatpush1.bf16.msra.mxu0 %v167
  %1146 = vmatprep.subr.bf16.mxu0 %v164
  %1147 = vmatpush1.bf16.msra.mxu0 %v163
  %1148 = vmatprep.subr.bf16.mxu0 0
  %1149 = vmatpush2.bf16.msra.mxu0 0
  %1150 = vmatprep.subr.bf16.mxu0 0
  %1151 = vmatpush2.bf16.msra.mxu0 0
  %1152 = vmatprep.subr.bf16.mxu0 0
  %1153 = vmatpush2.bf16.msra.mxu0 0
  %1154 = vmatprep.subr.bf16.mxu0 0
  %1155 = vmatpush2.bf16.msra.mxu0 0
  %1156 = vmatprep.subr.bf16.mxu0 0
  %1157 = vmatpush2.bf16.msra.mxu0 0
  %1158 = vmatprep.subr.bf16.mxu0 0
  %1159 = vmatpush2.bf16.msra.mxu0 0
  %1160 = vmatprep.subr.bf16.mxu0 0
  %1161 = vmatpush2.bf16.msra.mxu0 0
  %1162 = vmatprep.subr.bf16.mxu0 0
  %1163 = vmatpush2.bf16.msra.mxu0 0
  %1164 = vmatprep.mubr.bf16.mxu0 0
  %1165 = vmatmul.mubr.bf16.gmra.mxu0 %v1090
  %v1166 = vpop.f32.mrf.mxu0
  %v1167 = vadd.f32 0.0, %v1166
  %v1168 = vpop.f32.mrf.mxu0
  %v1169 = vadd.f32 0.0, %v1168
  %v1170 = vpop.f32.mrf.mxu0
  %v1171 = vpop.f32.mrf.mxu0
  %1172 = vdwg.mxu0
  %v1173 = vadd.f32 %v1086, %v1126
  %v1174 = vadd.f32 %v1087, %v1128
  %v1175 = vadd.f32 %v1088, %v1167
  %v1176 = vadd.f32 %v1089, %v1169
  %v1177 = vxor.u32 %v1173, 2147483648
  %v1178 = vmul.f32 %v1177, 1.442695
  %v1179 = vpow.pop %v1178
  %v1180 = vadd.f32 %v1179, 1.0
  %v1181 = vrcp.pop %v1180
  %v1182 = vmul.f32 1.0, %v1181
  %v1183 = vxor.u32 %v1174, 2147483648
  %v1184 = vmul.f32 %v1183, 1.442695
  %v1185 = vpow.pop %v1184
  %v1186 = vadd.f32 %v1185, 1.0
  %v1187 = vrcp.pop %v1186
  %v1188 = vmul.f32 1.0, %v1187
  %v1189 = vtanh.pop %v1175
  %v1190 = vxor.u32 %v1176, 2147483648
  %v1191 = vmul.f32 %v1190, 1.442695
  %v1192 = vpow.pop %v1191
  %v1193 = vadd.f32 %v1192, 1.0
  %v1194 = vrcp.pop %v1193
  %v1195 = vmul.f32 1.0, %v1194
  %v1196 = vmul.f32 %v1188, %v1081
  %v1197 = vmul.f32 %v1182, %v1189
  %v1198 = vadd.f32 %v1196, %v1197
  %v1199 = vtanh.pop %v1198
  %v1200 = vmul.f32 %v1195, %v1199
  %s1201 = sadd.s32 %s57, 7
  %v1202 = vstv %s1201
  %vm1203 = vcmp.gt.s32.totalorder %v24, %v1202
  %v1204 = vsel %vm1203, %v1200, %v1080
  %v1205 = vsel %vm1203, %v1198, %v1081
  %v1206 = vsel %vm1203, %v1200, 0.0
  %s1207 = scalar_lea.vmem %s3, 56
  %1208 = vst [vmem:[%s1207] sm:$0xff] %v1206
  %1209 = vst [vmem:[#allocation2] sm:$0xff] %v1204
  %1210 = vst [vmem:[#allocation3] sm:$0xff] %v1205
  // Predicated region
  $region18: #{encoder_latent_forward.1} parent=0 // pred_check
    %p1211 = pneg %p18
  $region19: #{encoder_latent_forward.1} parent=0 // pred_check_branch
    %1213 = sbr.rel (%p1211) target = $region21
  $region20: #{encoder_latent_forward.1} parent=0 // pred_region
    %1214 = vst [vmem:[%s4] sm:$0xff] %v1204
    %1215 = vst [vmem:[%s5] sm:$0xff] %v1205
  $region21: #{encoder_latent_forward.1} parent=0 // pred_fallthru
    _
  // Predicated region
  $region22: #{encoder_latent_forward.1} parent=0 // pred_check
    _
  $region23: #{encoder_latent_forward.1} parent=0 // pred_check_branch
    %1217 = sbr.rel (0) target = $region25
  $region24: #{encoder_latent_forward.1} parent=0 // pred_region
    _
  $region25: #{encoder_latent_forward.1} parent=0 // pred_fallthru
    _
  // Predicated region
  $region26: #{encoder_latent_forward.1} parent=0 // pred_check
    _
  $region27: #{encoder_latent_forward.1} parent=0 // pred_check_branch
    %1219 = sbr.rel (0) target = $region29
  $region28: #{encoder_latent_forward.1} parent=0 // pred_region
    _
  $region29: #{encoder_latent_forward.1} parent=0 // pred_fallthru
    _
  // Predicated region
  $region30: #{encoder_latent_forward.1} parent=0 // pred_check
    _
  $region31: #{encoder_latent_forward.1} parent=0 // pred_check_branch
    %1221 = sbr.rel (0) target = $region33
  $region32: #{encoder_latent_forward.1} parent=0 // pred_region
    _
  $region33: #{encoder_latent_forward.1} parent=0 // pred_fallthru
    _
  // Predicated region
  $region34: #{encoder_latent_forward.1} parent=0 // pred_check
    _
  $region35: #{encoder_latent_forward.1} parent=0 // pred_check_branch
    %1223 = sbr.rel (0) target = $region37
  $region36: #{encoder_latent_forward.1} parent=0 // pred_region
    _
  $region37: #{encoder_latent_forward.1} parent=0 // pred_fallthru
    _
  // Predicated region
  $region38: #{encoder_latent_forward.1} parent=0 // pred_check
    _
  $region39: #{encoder_latent_forward.1} parent=0 // pred_check_branch
    %1225 = sbr.rel (0) target = $region41
  $region40: #{encoder_latent_forward.1} parent=0 // pred_region
    _
  $region41: #{encoder_latent_forward.1} parent=0 // pred_fallthru
    _
  // Predicated region
  $region42: #{encoder_latent_forward.1} parent=0 // pred_check
    _
  $region43: #{encoder_latent_forward.1} parent=0 // pred_check_branch
    %1227 = sbr.rel (0) target = $region45
  $region44: #{encoder_latent_forward.1} parent=0 // pred_region
    _
  $region45: #{encoder_latent_forward.1} parent=0 // pred_fallthru
    _

</llo_original>
